<compile_context>
chip_gen: v5e
topology: v5e:2x2
jax: 0.10.0
libtpu: 0.0.40
codegen_flags: <defaults>
</compile_context>

<pallas_src>
import functools

import jax
import jax.numpy as jnp
from jax.experimental import pallas as pl
from jax.experimental.pallas import tpu as pltpu


CPAD = 128  # lane-dense channel padding


# ----------------------------------------------------------------------------
# Fused Pallas kernel: all temporal blocks + linear head, one batch element
# ----------------------------------------------------------------------------
def fused_tcn_kernel(x_ref, w1_ref, b1_ref, w2_ref, b2_ref, wd_ref, bd_ref,
                     wh_ref, bh_ref, o_ref, xp_ref, *,
                     K, dilations, has_ds, T, P, pad_rows):
    """Per-batch fused TCN forward.

    x_ref : (T, CPAD)                input, channels zero-padded to 128 lanes
    w1_ref: (L, K*CPAD, CPAD)        conv1 im2col weights (per block)
    b1_ref: (L, 1, CPAD)
    w2_ref: (L, K*CPAD, CPAD)        conv2 im2col weights
    b2_ref: (L, 1, CPAD)
    wd_ref: (n_ds, CPAD, CPAD)       1x1 downsample weights (only for ds blocks)
    bd_ref: (n_ds, 1, CPAD)
    wh_ref: (CPAD, CPAD)             linear head weight (padded)
    bh_ref: (1, CPAD)
    o_ref : (P, CPAD)                head output (padded lanes are zero)
    xp_ref: (pad_rows + T, CPAD)     VMEM scratch: causal zero pad + activation
    """
    # Zero the causal-pad region once; write this batch element's input below it.
    xp_ref[0:pad_rows, :] = jnp.zeros((pad_rows, CPAD), jnp.float32)
    xp_ref[pad_rows:pad_rows + T, :] = x_ref[...]

    ds_idx = 0
    for i, d in enumerate(dilations):           # static unroll over blocks
        pad = (K - 1) * d

        x_cur = xp_ref[pad_rows:pad_rows + T, :]            # block input (T, CPAD)

        # conv1 (causal dilated) as one im2col matmul; dropout1 == identity.
        slab1 = jnp.concatenate(
            [xp_ref[pad_rows - pad + j * d: pad_rows - pad + j * d + T, :]
             for j in range(K)], axis=1)                    # (T, K*CPAD)
        h1 = jnp.maximum(
            jnp.dot(slab1, w1_ref[i], preferred_element_type=jnp.float32)
            + b1_ref[i], 0.0)

        # conv2: re-use the same zero-padded scratch; dropout2 == identity.
        xp_ref[pad_rows:pad_rows + T, :] = h1
        slab2 = jnp.concatenate(
            [xp_ref[pad_rows - pad + j * d: pad_rows - pad + j * d + T, :]
             for j in range(K)], axis=1)                    # (T, K*CPAD)
        h2 = jnp.maximum(
            jnp.dot(slab2, w2_ref[i], preferred_element_type=jnp.float32)
            + b2_ref[i], 0.0)

        # residual (1x1 conv downsample iff Cin != Cout) + final ReLU
        if has_ds[i]:
            res = jnp.dot(x_cur, wd_ref[ds_idx],
                          preferred_element_type=jnp.float32) + bd_ref[ds_idx]
            ds_idx += 1
        else:
            res = x_cur
        xp_ref[pad_rows:pad_rows + T, :] = jnp.maximum(h2 + res, 0.0)

    # Linear head on the last P timesteps, fused while data is still in VMEM.
    y_last = xp_ref[pad_rows + T - P: pad_rows + T, :]       # (P, CPAD)
    o_ref[...] = (jnp.dot(y_last, wh_ref[...],
                          preferred_element_type=jnp.float32) + bh_ref[...])


# ----------------------------------------------------------------------------
# Wrapper: pack/pad weights, set up specs, single pallas_call
# ----------------------------------------------------------------------------
def tcn_model_forward(x, block_params, head_params, *, kernel_size,
                      predict_time_steps):
    """x: (B, T, n_features) -> (predict_time_steps, B, n_features)."""
    B, T, Cin = x.shape
    K = kernel_size
    L = len(block_params)
    P = predict_time_steps
    dilations = tuple(2 ** i for i in range(L))
    has_ds = tuple(bool(p["has_ds"]) for p in block_params)
    maxpad = (K - 1) * dilations[-1]
    pad_rows = ((maxpad + 7) // 8) * 8          # sublane-aligned causal pad rows

    # Input: channels zero-padded to 128 lanes (single tiny one-time pad).
    xp = jnp.pad(x.astype(jnp.float32), ((0, 0), (0, 0), (0, CPAD - Cin)))

    # Pack + lane-pad weights once (im2col layout for convs).
    w1s, b1s, w2s, b2s, wds, bds = [], [], [], [], [], []
    for p in block_params:
        _, ci, co = p["w1"].shape
        w1s.append(jnp.pad(p["w1"], ((0, 0), (0, CPAD - ci), (0, CPAD - co)))
                   .reshape(K * CPAD, CPAD))
        b1s.append(jnp.pad(p["b1"], ((0, 0), (0, CPAD - co))))
        w2s.append(jnp.pad(p["w2"], ((0, 0), (0, CPAD - co), (0, CPAD - co)))
                   .reshape(K * CPAD, CPAD))
        b2s.append(jnp.pad(p["b2"], ((0, 0), (0, CPAD - co))))
        if p["has_ds"]:
            wds.append(jnp.pad(p["wd"], ((0, CPAD - ci), (0, CPAD - co))))
            bds.append(jnp.pad(p["bd"], ((0, 0), (0, CPAD - co))))
    w1a, b1a = jnp.stack(w1s), jnp.stack(b1s)
    w2a, b2a = jnp.stack(w2s), jnp.stack(b2s)
    if wds:
        wda, bda = jnp.stack(wds), jnp.stack(bds)
    else:  # no block needs a downsample; pass an (unused) dummy
        wda = jnp.zeros((1, CPAD, CPAD), jnp.float32)
        bda = jnp.zeros((1, 1, CPAD), jnp.float32)
    n_ds = wda.shape[0]

    wT, bh = head_params
    Clast, F = wT.shape
    wha = jnp.pad(wT, ((0, CPAD - Clast), (0, CPAD - F)))
    bha = jnp.pad(bh, ((0, 0), (0, CPAD - F)))

    kernel = functools.partial(fused_tcn_kernel, K=K, dilations=dilations,
                               has_ds=has_ds, T=T, P=P, pad_rows=pad_rows)
    out_pad = pl.pallas_call(
        kernel,
        out_shape=jax.ShapeDtypeStruct((B, P, CPAD), jnp.float32),
        grid=(B,),
        in_specs=[
            pl.BlockSpec((None, T, CPAD), lambda b: (b, 0, 0)),       # x (per batch)
            pl.BlockSpec((L, K * CPAD, CPAD), lambda b: (0, 0, 0)),   # w1 (all blocks)
            pl.BlockSpec((L, 1, CPAD), lambda b: (0, 0, 0)),          # b1
            pl.BlockSpec((L, K * CPAD, CPAD), lambda b: (0, 0, 0)),   # w2
            pl.BlockSpec((L, 1, CPAD), lambda b: (0, 0, 0)),          # b2
            pl.BlockSpec((n_ds, CPAD, CPAD), lambda b: (0, 0, 0)),    # downsample w
            pl.BlockSpec((n_ds, 1, CPAD), lambda b: (0, 0, 0)),       # downsample b
            pl.BlockSpec((CPAD, CPAD), lambda b: (0, 0)),             # head weight
            pl.BlockSpec((1, CPAD), lambda b: (0, 0)),                # head bias
        ],
        out_specs=pl.BlockSpec((None, P, CPAD), lambda b: (b, 0, 0)),
        scratch_shapes=[pltpu.VMEM((pad_rows + T, CPAD), jnp.float32)],
        compiler_params=pltpu.CompilerParams(dimension_semantics=("parallel",)),
    )(xp, w1a, b1a, w2a, b2a, wda, bda, wha, bha)

    out = out_pad[:, :, :F]                     # drop lane padding -> (B, P, F)
    return jnp.transpose(out, (1, 0, 2))        # (P, B, F)


# ----------------------------------------------------------------------------
# Pure-JAX reference (same math, unpadded) for a correctness cross-check
# ----------------------------------------------------------------------------
def tcn_reference(x, block_params, head_params, *, kernel_size,
                  predict_time_steps):
    y = x.astype(jnp.float32)
    B, T, _ = y.shape
    K = kernel_size

    def causal_conv(z, w, b, d, pad):
        zp = jnp.pad(z, ((0, 0), (pad, 0), (0, 0)))
        acc = sum(jnp.einsum("btc,cf->btf", zp[:, j * d:j * d + T, :], w[j])
                  for j in range(K))
        return acc + b

    for i, p in enumerate(block_params):
        d = 2 ** i
        pad = (K - 1) * d
        h1 = jax.nn.relu(causal_conv(y, p["w1"], p["b1"], d, pad))
        h2 = jax.nn.relu(causal_conv(h1, p["w2"], p["b2"], d, pad))
        res = (jnp.einsum("btc,cf->btf", y, p["wd"]) + p["bd"]) if p["has_ds"] else y
        y = jax.nn.relu(h2 + res)
    wT, bl = head_params
    out = jnp.einsum("bpc,cf->bpf", y[:, -predict_time_steps:, :], wT) + bl
    return jnp.transpose(out, (1, 0, 2))


# ----------------------------------------------------------------------------
# Deterministic parameter init (effective weights; weight_norm absorbed)
# ----------------------------------------------------------------------------
def init_params(key, n_features, num_channels, kernel_size):
    blocks = []
    cin = n_features
    for cout in num_channels:
        key, k1, k2, k3, k4, k5, k6 = jax.random.split(key, 7)
        w1 = 0.01 * jax.random.normal(k1, (kernel_size, cin, cout), jnp.float32)
        b1 = 0.01 * jax.random.normal(k2, (1, cout), jnp.float32)
        w2 = 0.01 * jax.random.normal(k3, (kernel_size, cout, cout), jnp.float32)
        b2 = 0.01 * jax.random.normal(k4, (1, cout), jnp.float32)
        has_ds = cin != cout
        if has_ds:
            wd = 0.01 * jax.random.normal(k5, (cin, cout), jnp.float32)
            bd = 0.01 * jax.random.normal(k6, (1, cout), jnp.float32)
        else:
            wd, bd = None, None                 # identity residual, no params
        blocks.append(dict(w1=w1, b1=b1, w2=w2, b2=b2, wd=wd, bd=bd, has_ds=has_ds))
        cin = cout
    key, kl1, kl2 = jax.random.split(key, 3)
    wT = 0.01 * jax.random.normal(kl1, (num_channels[-1], n_features), jnp.float32)
    bl = 0.01 * jax.random.normal(kl2, (1, n_features), jnp.float32)
    return blocks, (wT, bl)


# ----------------------------------------------------------------------------
if __name__ == "__main__":
    n_features = 4
    num_channels = [32, 32, 40]
    kernel_size = 3
    predict_time_steps = 1
    B, T = 2, 16

    key = jax.random.PRNGKey(0)
    key, kp, kx = jax.random.split(key, 3)
    block_params, head_params = init_params(kp, n_features, num_channels,
                                            kernel_size)
    x = jax.random.normal(kx, (B, T, n_features), jnp.float32)

    out = tcn_model_forward(x, block_params, head_params,
                            kernel_size=kernel_size,
                            predict_time_steps=predict_time_steps)
    out = jax.block_until_ready(out)

    ref = tcn_reference(x, block_params, head_params,
                        kernel_size=kernel_size,
                        predict_time_steps=predict_time_steps)

    assert out.shape == (predict_time_steps, B, n_features), out.shape
    assert jnp.all(jnp.isfinite(out))
    assert jnp.allclose(out, ref, rtol=1e-4, atol=1e-5), \
        float(jnp.max(jnp.abs(out - ref)))
    print("KERNEL_OK")
</pallas_src>

<mosaic_0001>
module attributes {stable_mosaic.version = 11 : i64} {
  func.func @fused_tcn_kernel(%arg0: i32, %arg1: memref<1x16x128xf32, #tpu.memory_space<vmem>>, %arg2: memref<3x384x128xf32, #tpu.memory_space<vmem>>, %arg3: memref<3x1x128xf32, #tpu.memory_space<vmem>>, %arg4: memref<3x384x128xf32, #tpu.memory_space<vmem>>, %arg5: memref<3x1x128xf32, #tpu.memory_space<vmem>>, %arg6: memref<2x128x128xf32, #tpu.memory_space<vmem>>, %arg7: memref<2x1x128xf32, #tpu.memory_space<vmem>>, %arg8: memref<128x128xf32, #tpu.memory_space<vmem>>, %arg9: memref<1x128xf32, #tpu.memory_space<vmem>>, %arg10: memref<1x1x128xf32, #tpu.memory_space<vmem>>, %arg11: memref<24x128xf32, #tpu.memory_space<vmem>>) attributes {dimension_semantics = [#tpu.dimension_semantics<parallel>], iteration_bounds = array<i64: 2>, scalar_prefetch = 0 : i64, scratch_operands = 1 : i64, tpu.core_type = #tpu.core_type<tc>, window_params = [{transform_indices = @transform_0, window_bounds = array<i64: 1, 16, 128>}, {pipeline_mode = #tpu.pipeline_mode<synchronous>, transform_indices = @transform_1, window_bounds = array<i64: 3, 384, 128>}, {pipeline_mode = #tpu.pipeline_mode<synchronous>, transform_indices = @transform_2, window_bounds = array<i64: 3, 1, 128>}, {pipeline_mode = #tpu.pipeline_mode<synchronous>, transform_indices = @transform_3, window_bounds = array<i64: 3, 384, 128>}, {pipeline_mode = #tpu.pipeline_mode<synchronous>, transform_indices = @transform_4, window_bounds = array<i64: 3, 1, 128>}, {pipeline_mode = #tpu.pipeline_mode<synchronous>, transform_indices = @transform_5, window_bounds = array<i64: 2, 128, 128>}, {pipeline_mode = #tpu.pipeline_mode<synchronous>, transform_indices = @transform_6, window_bounds = array<i64: 2, 1, 128>}, {pipeline_mode = #tpu.pipeline_mode<synchronous>, transform_indices = @transform_7, window_bounds = array<i64: 128, 128>}, {pipeline_mode = #tpu.pipeline_mode<synchronous>, transform_indices = @transform_8, window_bounds = array<i64: 1, 128>}, {transform_indices = @transform_9, window_bounds = array<i64: 1, 1, 128>}]} {
    %cst = arith.constant 0.000000e+00 : f32
    %0 = vector.broadcast %cst : f32 to vector<8x128xf32>
    %c0 = arith.constant 0 : index
    %c0_0 = arith.constant 0 : index
    %1 = vector.load %arg11[%c0, %c0_0] : memref<24x128xf32, #tpu.memory_space<vmem>>, vector<8x128xf32>
    tpu.vector_store %arg11[%c0, %c0_0], %0 {strides = array<i32>} : memref<24x128xf32, #tpu.memory_space<vmem>>, vector<8x128xf32>,
    %c0_1 = arith.constant 0 : index
    %c0_2 = arith.constant 0 : index
    %c0_3 = arith.constant 0 : index
    %2 = vector.load %arg1[%c0_1, %c0_2, %c0_3] : memref<1x16x128xf32, #tpu.memory_space<vmem>>, vector<1x16x128xf32>
    %3 = vector.shape_cast %2 : vector<1x16x128xf32> to vector<16x128xf32>
    %c8 = arith.constant 8 : index
    %c0_4 = arith.constant 0 : index
    %4 = vector.load %arg11[%c8, %c0_4] : memref<24x128xf32, #tpu.memory_space<vmem>>, vector<16x128xf32>
    tpu.vector_store %arg11[%c8, %c0_4], %3 {strides = array<i32>} : memref<24x128xf32, #tpu.memory_space<vmem>>, vector<16x128xf32>,
    %c8_5 = arith.constant 8 : index
    %c0_6 = arith.constant 0 : index
    %5 = vector.load %arg11[%c8_5, %c0_6] : memref<24x128xf32, #tpu.memory_space<vmem>>, vector<16x128xf32>
    %c6 = arith.constant 6 : index
    %c0_7 = arith.constant 0 : index
    %6 = vector.load %arg11[%c6, %c0_7] : memref<24x128xf32, #tpu.memory_space<vmem>>, vector<16x128xf32>
    %c7 = arith.constant 7 : index
    %c0_8 = arith.constant 0 : index
    %7 = vector.load %arg11[%c7, %c0_8] : memref<24x128xf32, #tpu.memory_space<vmem>>, vector<16x128xf32>
    %c8_9 = arith.constant 8 : index
    %c0_10 = arith.constant 0 : index
    %8 = vector.load %arg11[%c8_9, %c0_10] : memref<24x128xf32, #tpu.memory_space<vmem>>, vector<16x128xf32>
    %9 = tpu.concatenate %6, %7, %8 in 1 : vector<16x128xf32>, vector<16x128xf32>, vector<16x128xf32> -> vector<16x384xf32>
    %c0_11 = arith.constant 0 : index
    %c0_12 = arith.constant 0 : index
    %c0_13 = arith.constant 0 : index
    %10 = vector.load %arg2[%c0_11, %c0_12, %c0_13] : memref<3x384x128xf32, #tpu.memory_space<vmem>>, vector<1x384x128xf32>
    %11 = vector.shape_cast %10 : vector<1x384x128xf32> to vector<384x128xf32>
    %cst_14 = arith.constant dense<0.000000e+00> : vector<16x128xf32>
    %12 = tpu.matmul %9, %11, %cst_14 {dimension_numbers = #tpu.dot_dimension_numbers<[1], [0], [0], [1], [0, 0, 1, 1], [], []>} : vector<16x384xf32>, vector<384x128xf32>, vector<16x128xf32> -> vector<16x128xf32>
    %c0_15 = arith.constant 0 : index
    %c0_16 = arith.constant 0 : index
    %c0_17 = arith.constant 0 : index
    %13 = vector.load %arg3[%c0_15, %c0_16, %c0_17] : memref<3x1x128xf32, #tpu.memory_space<vmem>>, vector<1x1x128xf32>
    %14 = vector.shape_cast %13 : vector<1x1x128xf32> to vector<1x128xf32>
    %15 = vector.broadcast %14 : vector<1x128xf32> to vector<16x128xf32>
    %16 = arith.addf %12, %15 : vector<16x128xf32>
    %cst_18 = arith.constant 0.000000e+00 : f32
    %17 = vector.broadcast %cst_18 : f32 to vector<16x128xf32>
    %18 = arith.maximumf %16, %17 : vector<16x128xf32>
    %c8_19 = arith.constant 8 : index
    %c0_20 = arith.constant 0 : index
    %19 = vector.load %arg11[%c8_19, %c0_20] : memref<24x128xf32, #tpu.memory_space<vmem>>, vector<16x128xf32>
    tpu.vector_store %arg11[%c8_19, %c0_20], %18 {strides = array<i32>} : memref<24x128xf32, #tpu.memory_space<vmem>>, vector<16x128xf32>,
    %c6_21 = arith.constant 6 : index
    %c0_22 = arith.constant 0 : index
    %20 = vector.load %arg11[%c6_21, %c0_22] : memref<24x128xf32, #tpu.memory_space<vmem>>, vector<16x128xf32>
    %c7_23 = arith.constant 7 : index
    %c0_24 = arith.constant 0 : index
    %21 = vector.load %arg11[%c7_23, %c0_24] : memref<24x128xf32, #tpu.memory_space<vmem>>, vector<16x128xf32>
    %c8_25 = arith.constant 8 : index
    %c0_26 = arith.constant 0 : index
    %22 = vector.load %arg11[%c8_25, %c0_26] : memref<24x128xf32, #tpu.memory_space<vmem>>, vector<16x128xf32>
    %23 = tpu.concatenate %20, %21, %22 in 1 : vector<16x128xf32>, vector<16x128xf32>, vector<16x128xf32> -> vector<16x384xf32>
    %c0_27 = arith.constant 0 : index
    %c0_28 = arith.constant 0 : index
    %c0_29 = arith.constant 0 : index
    %24 = vector.load %arg4[%c0_27, %c0_28, %c0_29] : memref<3x384x128xf32, #tpu.memory_space<vmem>>, vector<1x384x128xf32>
    %25 = vector.shape_cast %24 : vector<1x384x128xf32> to vector<384x128xf32>
    %cst_30 = arith.constant dense<0.000000e+00> : vector<16x128xf32>
    %26 = tpu.matmul %23, %25, %cst_30 {dimension_numbers = #tpu.dot_dimension_numbers<[1], [0], [0], [1], [0, 0, 1, 1], [], []>} : vector<16x384xf32>, vector<384x128xf32>, vector<16x128xf32> -> vector<16x128xf32>
    %c0_31 = arith.constant 0 : index
    %c0_32 = arith.constant 0 : index
    %c0_33 = arith.constant 0 : index
    %27 = vector.load %arg5[%c0_31, %c0_32, %c0_33] : memref<3x1x128xf32, #tpu.memory_space<vmem>>, vector<1x1x128xf32>
    %28 = vector.shape_cast %27 : vector<1x1x128xf32> to vector<1x128xf32>
    %29 = vector.broadcast %28 : vector<1x128xf32> to vector<16x128xf32>
    %30 = arith.addf %26, %29 : vector<16x128xf32>
    %cst_34 = arith.constant 0.000000e+00 : f32
    %31 = vector.broadcast %cst_34 : f32 to vector<16x128xf32>
    %32 = arith.maximumf %30, %31 : vector<16x128xf32>
    %c0_35 = arith.constant 0 : index
    %c0_36 = arith.constant 0 : index
    %c0_37 = arith.constant 0 : index
    %33 = vector.load %arg6[%c0_35, %c0_36, %c0_37] : memref<2x128x128xf32, #tpu.memory_space<vmem>>, vector<1x128x128xf32>
    %34 = vector.shape_cast %33 : vector<1x128x128xf32> to vector<128x128xf32>
    %cst_38 = arith.constant dense<0.000000e+00> : vector<16x128xf32>
    %35 = tpu.matmul %5, %34, %cst_38 {dimension_numbers = #tpu.dot_dimension_numbers<[1], [0], [0], [1], [0, 0, 1, 1], [], []>} : vector<16x128xf32>, vector<128x128xf32>, vector<16x128xf32> -> vector<16x128xf32>
    %c0_39 = arith.constant 0 : index
    %c0_40 = arith.constant 0 : index
    %c0_41 = arith.constant 0 : index
    %36 = vector.load %arg7[%c0_39, %c0_40, %c0_41] : memref<2x1x128xf32, #tpu.memory_space<vmem>>, vector<1x1x128xf32>
    %37 = vector.shape_cast %36 : vector<1x1x128xf32> to vector<1x128xf32>
    %38 = vector.broadcast %37 : vector<1x128xf32> to vector<16x128xf32>
    %39 = arith.addf %35, %38 : vector<16x128xf32>
    %40 = arith.addf %32, %39 : vector<16x128xf32>
    %cst_42 = arith.constant 0.000000e+00 : f32
    %41 = vector.broadcast %cst_42 : f32 to vector<16x128xf32>
    %42 = arith.maximumf %40, %41 : vector<16x128xf32>
    %c8_43 = arith.constant 8 : index
    %c0_44 = arith.constant 0 : index
    %43 = vector.load %arg11[%c8_43, %c0_44] : memref<24x128xf32, #tpu.memory_space<vmem>>, vector<16x128xf32>
    tpu.vector_store %arg11[%c8_43, %c0_44], %42 {strides = array<i32>} : memref<24x128xf32, #tpu.memory_space<vmem>>, vector<16x128xf32>,
    %c8_45 = arith.constant 8 : index
    %c0_46 = arith.constant 0 : index
    %44 = vector.load %arg11[%c8_45, %c0_46] : memref<24x128xf32, #tpu.memory_space<vmem>>, vector<16x128xf32>
    %c4 = arith.constant 4 : index
    %c0_47 = arith.constant 0 : index
    %45 = vector.load %arg11[%c4, %c0_47] : memref<24x128xf32, #tpu.memory_space<vmem>>, vector<16x128xf32>
    %c6_48 = arith.constant 6 : index
    %c0_49 = arith.constant 0 : index
    %46 = vector.load %arg11[%c6_48, %c0_49] : memref<24x128xf32, #tpu.memory_space<vmem>>, vector<16x128xf32>
    %c8_50 = arith.constant 8 : index
    %c0_51 = arith.constant 0 : index
    %47 = vector.load %arg11[%c8_50, %c0_51] : memref<24x128xf32, #tpu.memory_space<vmem>>, vector<16x128xf32>
    %48 = tpu.concatenate %45, %46, %47 in 1 : vector<16x128xf32>, vector<16x128xf32>, vector<16x128xf32> -> vector<16x384xf32>
    %c1 = arith.constant 1 : index
    %c0_52 = arith.constant 0 : index
    %c0_53 = arith.constant 0 : index
    %49 = vector.load %arg2[%c1, %c0_52, %c0_53] : memref<3x384x128xf32, #tpu.memory_space<vmem>>, vector<1x384x128xf32>
    %50 = vector.shape_cast %49 : vector<1x384x128xf32> to vector<384x128xf32>
    %cst_54 = arith.constant dense<0.000000e+00> : vector<16x128xf32>
    %51 = tpu.matmul %48, %50, %cst_54 {dimension_numbers = #tpu.dot_dimension_numbers<[1], [0], [0], [1], [0, 0, 1, 1], [], []>} : vector<16x384xf32>, vector<384x128xf32>, vector<16x128xf32> -> vector<16x128xf32>
    %c1_55 = arith.constant 1 : index
    %c0_56 = arith.constant 0 : index
    %c0_57 = arith.constant 0 : index
    %52 = vector.load %arg3[%c1_55, %c0_56, %c0_57] : memref<3x1x128xf32, #tpu.memory_space<vmem>>, vector<1x1x128xf32>
    %53 = vector.shape_cast %52 : vector<1x1x128xf32> to vector<1x128xf32>
    %54 = vector.broadcast %53 : vector<1x128xf32> to vector<16x128xf32>
    %55 = arith.addf %51, %54 : vector<16x128xf32>
    %cst_58 = arith.constant 0.000000e+00 : f32
    %56 = vector.broadcast %cst_58 : f32 to vector<16x128xf32>
    %57 = arith.maximumf %55, %56 : vector<16x128xf32>
    %c8_59 = arith.constant 8 : index
    %c0_60 = arith.constant 0 : index
    %58 = vector.load %arg11[%c8_59, %c0_60] : memref<24x128xf32, #tpu.memory_space<vmem>>, vector<16x128xf32>
    tpu.vector_store %arg11[%c8_59, %c0_60], %57 {strides = array<i32>} : memref<24x128xf32, #tpu.memory_space<vmem>>, vector<16x128xf32>,
    %c4_61 = arith.constant 4 : index
    %c0_62 = arith.constant 0 : index
    %59 = vector.load %arg11[%c4_61, %c0_62] : memref<24x128xf32, #tpu.memory_space<vmem>>, vector<16x128xf32>
    %c6_63 = arith.constant 6 : index
    %c0_64 = arith.constant 0 : index
    %60 = vector.load %arg11[%c6_63, %c0_64] : memref<24x128xf32, #tpu.memory_space<vmem>>, vector<16x128xf32>
    %c8_65 = arith.constant 8 : index
    %c0_66 = arith.constant 0 : index
    %61 = vector.load %arg11[%c8_65, %c0_66] : memref<24x128xf32, #tpu.memory_space<vmem>>, vector<16x128xf32>
    %62 = tpu.concatenate %59, %60, %61 in 1 : vector<16x128xf32>, vector<16x128xf32>, vector<16x128xf32> -> vector<16x384xf32>
    %c1_67 = arith.constant 1 : index
    %c0_68 = arith.constant 0 : index
    %c0_69 = arith.constant 0 : index
    %63 = vector.load %arg4[%c1_67, %c0_68, %c0_69] : memref<3x384x128xf32, #tpu.memory_space<vmem>>, vector<1x384x128xf32>
    %64 = vector.shape_cast %63 : vector<1x384x128xf32> to vector<384x128xf32>
    %cst_70 = arith.constant dense<0.000000e+00> : vector<16x128xf32>
    %65 = tpu.matmul %62, %64, %cst_70 {dimension_numbers = #tpu.dot_dimension_numbers<[1], [0], [0], [1], [0, 0, 1, 1], [], []>} : vector<16x384xf32>, vector<384x128xf32>, vector<16x128xf32> -> vector<16x128xf32>
    %c1_71 = arith.constant 1 : index
    %c0_72 = arith.constant 0 : index
    %c0_73 = arith.constant 0 : index
    %66 = vector.load %arg5[%c1_71, %c0_72, %c0_73] : memref<3x1x128xf32, #tpu.memory_space<vmem>>, vector<1x1x128xf32>
    %67 = vector.shape_cast %66 : vector<1x1x128xf32> to vector<1x128xf32>
    %68 = vector.broadcast %67 : vector<1x128xf32> to vector<16x128xf32>
    %69 = arith.addf %65, %68 : vector<16x128xf32>
    %cst_74 = arith.constant 0.000000e+00 : f32
    %70 = vector.broadcast %cst_74 : f32 to vector<16x128xf32>
    %71 = arith.maximumf %69, %70 : vector<16x128xf32>
    %72 = arith.addf %71, %44 : vector<16x128xf32>
    %cst_75 = arith.constant 0.000000e+00 : f32
    %73 = vector.broadcast %cst_75 : f32 to vector<16x128xf32>
    %74 = arith.maximumf %72, %73 : vector<16x128xf32>
    %c8_76 = arith.constant 8 : index
    %c0_77 = arith.constant 0 : index
    %75 = vector.load %arg11[%c8_76, %c0_77] : memref<24x128xf32, #tpu.memory_space<vmem>>, vector<16x128xf32>
    tpu.vector_store %arg11[%c8_76, %c0_77], %74 {strides = array<i32>} : memref<24x128xf32, #tpu.memory_space<vmem>>, vector<16x128xf32>,
    %c8_78 = arith.constant 8 : index
    %c0_79 = arith.constant 0 : index
    %76 = vector.load %arg11[%c8_78, %c0_79] : memref<24x128xf32, #tpu.memory_space<vmem>>, vector<16x128xf32>
    %c0_80 = arith.constant 0 : index
    %c0_81 = arith.constant 0 : index
    %77 = vector.load %arg11[%c0_80, %c0_81] : memref<24x128xf32, #tpu.memory_space<vmem>>, vector<16x128xf32>
    %c4_82 = arith.constant 4 : index
    %c0_83 = arith.constant 0 : index
    %78 = vector.load %arg11[%c4_82, %c0_83] : memref<24x128xf32, #tpu.memory_space<vmem>>, vector<16x128xf32>
    %c8_84 = arith.constant 8 : index
    %c0_85 = arith.constant 0 : index
    %79 = vector.load %arg11[%c8_84, %c0_85] : memref<24x128xf32, #tpu.memory_space<vmem>>, vector<16x128xf32>
    %80 = tpu.concatenate %77, %78, %79 in 1 : vector<16x128xf32>, vector<16x128xf32>, vector<16x128xf32> -> vector<16x384xf32>
    %c2 = arith.constant 2 : index
    %c0_86 = arith.constant 0 : index
    %c0_87 = arith.constant 0 : index
    %81 = vector.load %arg2[%c2, %c0_86, %c0_87] : memref<3x384x128xf32, #tpu.memory_space<vmem>>, vector<1x384x128xf32>
    %82 = vector.shape_cast %81 : vector<1x384x128xf32> to vector<384x128xf32>
    %cst_88 = arith.constant dense<0.000000e+00> : vector<16x128xf32>
    %83 = tpu.matmul %80, %82, %cst_88 {dimension_numbers = #tpu.dot_dimension_numbers<[1], [0], [0], [1], [0, 0, 1, 1], [], []>} : vector<16x384xf32>, vector<384x128xf32>, vector<16x128xf32> -> vector<16x128xf32>
    %c2_89 = arith.constant 2 : index
    %c0_90 = arith.constant 0 : index
    %c0_91 = arith.constant 0 : index
    %84 = vector.load %arg3[%c2_89, %c0_90, %c0_91] : memref<3x1x128xf32, #tpu.memory_space<vmem>>, vector<1x1x128xf32>
    %85 = vector.shape_cast %84 : vector<1x1x128xf32> to vector<1x128xf32>
    %86 = vector.broadcast %85 : vector<1x128xf32> to vector<16x128xf32>
    %87 = arith.addf %83, %86 : vector<16x128xf32>
    %cst_92 = arith.constant 0.000000e+00 : f32
    %88 = vector.broadcast %cst_92 : f32 to vector<16x128xf32>
    %89 = arith.maximumf %87, %88 : vector<16x128xf32>
    %c8_93 = arith.constant 8 : index
    %c0_94 = arith.constant 0 : index
    %90 = vector.load %arg11[%c8_93, %c0_94] : memref<24x128xf32, #tpu.memory_space<vmem>>, vector<16x128xf32>
    tpu.vector_store %arg11[%c8_93, %c0_94], %89 {strides = array<i32>} : memref<24x128xf32, #tpu.memory_space<vmem>>, vector<16x128xf32>,
    %c0_95 = arith.constant 0 : index
    %c0_96 = arith.constant 0 : index
    %91 = vector.load %arg11[%c0_95, %c0_96] : memref<24x128xf32, #tpu.memory_space<vmem>>, vector<16x128xf32>
    %c4_97 = arith.constant 4 : index
    %c0_98 = arith.constant 0 : index
    %92 = vector.load %arg11[%c4_97, %c0_98] : memref<24x128xf32, #tpu.memory_space<vmem>>, vector<16x128xf32>
    %c8_99 = arith.constant 8 : index
    %c0_100 = arith.constant 0 : index
    %93 = vector.load %arg11[%c8_99, %c0_100] : memref<24x128xf32, #tpu.memory_space<vmem>>, vector<16x128xf32>
    %94 = tpu.concatenate %91, %92, %93 in 1 : vector<16x128xf32>, vector<16x128xf32>, vector<16x128xf32> -> vector<16x384xf32>
    %c2_101 = arith.constant 2 : index
    %c0_102 = arith.constant 0 : index
    %c0_103 = arith.constant 0 : index
    %95 = vector.load %arg4[%c2_101, %c0_102, %c0_103] : memref<3x384x128xf32, #tpu.memory_space<vmem>>, vector<1x384x128xf32>
    %96 = vector.shape_cast %95 : vector<1x384x128xf32> to vector<384x128xf32>
    %cst_104 = arith.constant dense<0.000000e+00> : vector<16x128xf32>
    %97 = tpu.matmul %94, %96, %cst_104 {dimension_numbers = #tpu.dot_dimension_numbers<[1], [0], [0], [1], [0, 0, 1, 1], [], []>} : vector<16x384xf32>, vector<384x128xf32>, vector<16x128xf32> -> vector<16x128xf32>
    %c2_105 = arith.constant 2 : index
    %c0_106 = arith.constant 0 : index
    %c0_107 = arith.constant 0 : index
    %98 = vector.load %arg5[%c2_105, %c0_106, %c0_107] : memref<3x1x128xf32, #tpu.memory_space<vmem>>, vector<1x1x128xf32>
    %99 = vector.shape_cast %98 : vector<1x1x128xf32> to vector<1x128xf32>
    %100 = vector.broadcast %99 : vector<1x128xf32> to vector<16x128xf32>
    %101 = arith.addf %97, %100 : vector<16x128xf32>
    %cst_108 = arith.constant 0.000000e+00 : f32
    %102 = vector.broadcast %cst_108 : f32 to vector<16x128xf32>
    %103 = arith.maximumf %101, %102 : vector<16x128xf32>
    %c1_109 = arith.constant 1 : index
    %c0_110 = arith.constant 0 : index
    %c0_111 = arith.constant 0 : index
    %104 = vector.load %arg6[%c1_109, %c0_110, %c0_111] : memref<2x128x128xf32, #tpu.memory_space<vmem>>, vector<1x128x128xf32>
    %105 = vector.shape_cast %104 : vector<1x128x128xf32> to vector<128x128xf32>
    %cst_112 = arith.constant dense<0.000000e+00> : vector<16x128xf32>
    %106 = tpu.matmul %76, %105, %cst_112 {dimension_numbers = #tpu.dot_dimension_numbers<[1], [0], [0], [1], [0, 0, 1, 1], [], []>} : vector<16x128xf32>, vector<128x128xf32>, vector<16x128xf32> -> vector<16x128xf32>
    %c1_113 = arith.constant 1 : index
    %c0_114 = arith.constant 0 : index
    %c0_115 = arith.constant 0 : index
    %107 = vector.load %arg7[%c1_113, %c0_114, %c0_115] : memref<2x1x128xf32, #tpu.memory_space<vmem>>, vector<1x1x128xf32>
    %108 = vector.shape_cast %107 : vector<1x1x128xf32> to vector<1x128xf32>
    %109 = vector.broadcast %108 : vector<1x128xf32> to vector<16x128xf32>
    %110 = arith.addf %106, %109 : vector<16x128xf32>
    %111 = arith.addf %103, %110 : vector<16x128xf32>
    %cst_116 = arith.constant 0.000000e+00 : f32
    %112 = vector.broadcast %cst_116 : f32 to vector<16x128xf32>
    %113 = arith.maximumf %111, %112 : vector<16x128xf32>
    %c8_117 = arith.constant 8 : index
    %c0_118 = arith.constant 0 : index
    %114 = vector.load %arg11[%c8_117, %c0_118] : memref<24x128xf32, #tpu.memory_space<vmem>>, vector<16x128xf32>
    tpu.vector_store %arg11[%c8_117, %c0_118], %113 {strides = array<i32>} : memref<24x128xf32, #tpu.memory_space<vmem>>, vector<16x128xf32>,
    %c23 = arith.constant 23 : index
    %c0_119 = arith.constant 0 : index
    %115 = vector.load %arg11[%c23, %c0_119] : memref<24x128xf32, #tpu.memory_space<vmem>>, vector<1x128xf32>
    %c0_120 = arith.constant 0 : index
    %c0_121 = arith.constant 0 : index
    %116 = vector.load %arg8[%c0_120, %c0_121] : memref<128x128xf32, #tpu.memory_space<vmem>>, vector<128x128xf32>
    %cst_122 = arith.constant dense<0.000000e+00> : vector<1x128xf32>
    %117 = tpu.matmul %115, %116, %cst_122 {dimension_numbers = #tpu.dot_dimension_numbers<[1], [0], [0], [1], [0, 0, 1, 1], [], []>} : vector<1x128xf32>, vector<128x128xf32>, vector<1x128xf32> -> vector<1x128xf32>
    %c0_123 = arith.constant 0 : index
    %c0_124 = arith.constant 0 : index
    %118 = vector.load %arg9[%c0_123, %c0_124] : memref<1x128xf32, #tpu.memory_space<vmem>>, vector<1x128xf32>
    %119 = arith.addf %117, %118 : vector<1x128xf32>
    %c0_125 = arith.constant 0 : index
    %c0_126 = arith.constant 0 : index
    %c0_127 = arith.constant 0 : index
    %120 = vector.load %arg10[%c0_125, %c0_126, %c0_127] : memref<1x1x128xf32, #tpu.memory_space<vmem>>, vector<1x1x128xf32>
    %121 = vector.shape_cast %120 : vector<1x1x128xf32> to vector<1x128xf32>
    %122 = vector.shape_cast %119 : vector<1x128xf32> to vector<1x1x128xf32>
    tpu.vector_store %arg10[%c0_125, %c0_126, %c0_127], %122 {strides = array<i32>} : memref<1x1x128xf32, #tpu.memory_space<vmem>>, vector<1x1x128xf32>,
    return
  }
  func.func @transform_0(%arg0: i32) -> (i32, i32, i32) {
    %c0_i32 = arith.constant 0 : i32
    %c0_i32_0 = arith.constant 0 : i32
    %c0_i32_1 = arith.constant 0 : i32
    return %arg0, %c0_i32, %c0_i32_0 : i32, i32, i32
  }
  func.func @transform_1(%arg0: i32) -> (i32, i32, i32) {
    %c0_i32 = arith.constant 0 : i32
    %c0_i32_0 = arith.constant 0 : i32
    %c0_i32_1 = arith.constant 0 : i32
    %c0_i32_2 = arith.constant 0 : i32
    return %c0_i32, %c0_i32_0, %c0_i32_1 : i32, i32, i32
  }
  func.func @transform_2(%arg0: i32) -> (i32, i32, i32) {
    %c0_i32 = arith.constant 0 : i32
    %c0_i32_0 = arith.constant 0 : i32
    %c0_i32_1 = arith.constant 0 : i32
    %c0_i32_2 = arith.constant 0 : i32
    return %c0_i32, %c0_i32_0, %c0_i32_1 : i32, i32, i32
  }
  func.func @transform_3(%arg0: i32) -> (i32, i32, i32) {
    %c0_i32 = arith.constant 0 : i32
    %c0_i32_0 = arith.constant 0 : i32
    %c0_i32_1 = arith.constant 0 : i32
    %c0_i32_2 = arith.constant 0 : i32
    return %c0_i32, %c0_i32_0, %c0_i32_1 : i32, i32, i32
  }
  func.func @transform_4(%arg0: i32) -> (i32, i32, i32) {
    %c0_i32 = arith.constant 0 : i32
    %c0_i32_0 = arith.constant 0 : i32
    %c0_i32_1 = arith.constant 0 : i32
    %c0_i32_2 = arith.constant 0 : i32
    return %c0_i32, %c0_i32_0, %c0_i32_1 : i32, i32, i32
  }
  func.func @transform_5(%arg0: i32) -> (i32, i32, i32) {
    %c0_i32 = arith.constant 0 : i32
    %c0_i32_0 = arith.constant 0 : i32
    %c0_i32_1 = arith.constant 0 : i32
    %c0_i32_2 = arith.constant 0 : i32
    return %c0_i32, %c0_i32_0, %c0_i32_1 : i32, i32, i32
  }
  func.func @transform_6(%arg0: i32) -> (i32, i32, i32) {
    %c0_i32 = arith.constant 0 : i32
    %c0_i32_0 = arith.constant 0 : i32
    %c0_i32_1 = arith.constant 0 : i32
    %c0_i32_2 = arith.constant 0 : i32
    return %c0_i32, %c0_i32_0, %c0_i32_1 : i32, i32, i32
  }
  func.func @transform_7(%arg0: i32) -> (i32, i32) {
    %c0_i32 = arith.constant 0 : i32
    %c0_i32_0 = arith.constant 0 : i32
    %c0_i32_1 = arith.constant 0 : i32
    return %c0_i32, %c0_i32_0 : i32, i32
  }
  func.func @transform_8(%arg0: i32) -> (i32, i32) {
    %c0_i32 = arith.constant 0 : i32
    %c0_i32_0 = arith.constant 0 : i32
    %c0_i32_1 = arith.constant 0 : i32
    return %c0_i32, %c0_i32_0 : i32, i32
  }
  func.func @transform_9(%arg0: i32) -> (i32, i32, i32) {
    %c0_i32 = arith.constant 0 : i32
    %c0_i32_0 = arith.constant 0 : i32
    %c0_i32_1 = arith.constant 0 : i32
    return %arg0, %c0_i32, %c0_i32_0 : i32, i32, i32
  }
}

</mosaic_0001>

<llo_original>
// kernel: tpu_custom_call.1
$region0: #{tpu_custom_call.1}
  #allocation0 [shape = 'u32[]', space=smem, size = 0x4, offset = 0x4, fixed_abs, tag = 'smem constant byte address 0x4 - core index']
  #allocation1 [shape = 'u32[72,128]{1,0:T(1,128)}', space=vmem, size = 0x9000, scoped, tag = 'internal scratch']
  #allocation2 [shape = 'f32[24,128]{1,0:T(8,128)}', space=vmem, size = 0x3000, scoped, tag = 'scratch operand']
  %s0 = inlined_call_operand.hbm [shape: f32[2,16,128], index: 0, kind: input, shape index: {}]
  %s1 = inlined_call_operand.hbm [shape: f32[3,384,128], index: 1, kind: input, shape index: {}]
  %s2 = inlined_call_operand.hbm [shape: f32[3,1,128], index: 2, kind: input, shape index: {}]
  %s3 = inlined_call_operand.hbm [shape: f32[3,384,128], index: 3, kind: input, shape index: {}]
  %s4 = inlined_call_operand.vmem [shape: f32[3,1,128], index: 4, kind: input, shape index: {}]
  %s5 = inlined_call_operand.hbm [shape: f32[2,128,128], index: 5, kind: input, shape index: {}]
  %s6 = inlined_call_operand.vmem [shape: f32[2,1,128], index: 6, kind: input, shape index: {}]
  %s7 = inlined_call_operand.hbm [shape: f32[128,128], index: 7, kind: input, shape index: {}]
  %s8 = inlined_call_operand.vmem [shape: f32[1,128], index: 8, kind: input, shape index: {}]
  %s9 = inlined_call_operand.hbm [shape: f32[2,1,128], index: 9, kind: output, shape index: {}]
  %s10 = sld [smem:[#allocation0]]
  $region93: #{tpu_custom_call.1} parent=0
    _
  %s12 = ssub.s32 1, %s10
  %s13 = scalar_select 0, %s12, %s10
  $region1: #{tpu_custom_call.1} parent=0
    #allocation3 [shape = 'u8[16384]{0}', space=vmem, size = 0x4000, scoped, tag = 'input window, operand 0']
    #allocation4 [shape = 's32[2]{0}', space=sflag, size = 0x8, scoped, tag = 'scoped memory for tpu_custom_call.1']
    #allocation5 [shape = 's32[2]{0}', space=sflag, size = 0x8, scoped, tag = 'scoped memory for tpu_custom_call.1']
    #allocation6 [shape = 'u8[589824]{0}', space=vmem, size = 0x90000, scoped, tag = 'input window, operand 1, single buffered']
    #allocation7 [shape = 's32[1]{0}', space=sflag, size = 0x4, scoped, tag = 'scoped memory for tpu_custom_call.1']
    #allocation8 [shape = 'u8[1536]{0}', space=vmem, size = 0x800, scoped, tag = 'input window, operand 2, single buffered']
    #allocation9 [shape = 'u8[589824]{0}', space=vmem, size = 0x90000, scoped, tag = 'input window, operand 3, single buffered']
    #allocation10 [shape = 's32[1]{0}', space=sflag, size = 0x4, scoped, tag = 'scoped memory for tpu_custom_call.1']
    #allocation11 [shape = 'u8[131072]{0}', space=vmem, size = 0x20000, scoped, tag = 'input window, operand 5, single buffered']
    #allocation12 [shape = 'u8[65536]{0}', space=vmem, size = 0x10000, scoped, tag = 'input window, operand 7, single buffered']
    #allocation13 [shape = 's32[1]{0}', space=sflag, size = 0x4, scoped, tag = 'scoped memory for tpu_custom_call.1']
    #allocation14 [shape = 'u8[1024]{0}', space=vmem, size = 0x400, scoped, tag = 'output window, operand 0']
    %14 = vsyncpa [#allocation4], 0
    %s15 = scalar_lea.sflag [#allocation4], 1
    %16 = vsyncpa %s15, 0
    %17 = vsyncpa [#allocation7], 0
    %18 = vsyncpa [#allocation10], 0
    %19 = vsyncpa [#allocation13], 0
    %20 = vsyncpa [#allocation5], 0
    %s21 = scalar_lea.sflag [#allocation5], 1
    %22 = vsyncpa %s21, 0
    loop: start=0, step=1, limit=4
    $region2: #{tpu_custom_call.1} parent=1 // loop_pre_header
      _
    $region3: #{tpu_custom_call.1} parent=1 // loop_header
      %s24 = sphi 0, %s28
      %p25 = scmp.ge.s32.totalorder %s24, 4
      %s34 = sphi 0, %s36
      %s37 = sphi 0, %s34
      %s38 = sphi 0, %s37
      %s54 = sphi 0, %s38
      %s58 = sphi 0, %s58
      %s60 = sphi 0, %s58
      %s61 = sphi 0, %s60
      %s75 = sphi 0, %s61
      %s79 = sphi 0, %s79
      %s81 = sphi 0, %s79
      %s82 = sphi 0, %s81
      %s96 = sphi 0, %s82
      %s100 = sphi 0, %s100
      %s102 = sphi 0, %s100
      %s103 = sphi 0, %s102
      %s117 = sphi 0, %s103
      %s121 = sphi 0, %s121
      %s123 = sphi 0, %s121
      %s124 = sphi 0, %s123
      %s138 = sphi 0, %s124
      %s142 = sphi 0, %s142
      %s144 = sphi 0, %s142
      %s145 = sphi 0, %s144
      %s159 = sphi 0, %s145
      %s163 = sphi 0, %s163
      %s165 = sphi 0, %s163
      %s166 = sphi 0, %s165
      %s180 = sphi 0, %s166
      %s184 = sphi 0, %s184
      %s186 = sphi 0, %s184
      %s187 = sphi 0, %s186
      %s201 = sphi 0, %s187
      %s205 = sphi 0, %s205
      %s207 = sphi 0, %s205
      %s208 = sphi 0, %s207
      %s222 = sphi 0, %s208
      %s228 = sphi 0, %s230
      %s231 = sphi 0, %s228
      %s232 = sphi 0, %s231
      %s248 = sphi 0, %s232
    $region4: #{tpu_custom_call.1} parent=1 // loop_header_branch
      %27 = sbr.rel (%p25) target = $region8
    $region5: #{tpu_custom_call.1} parent=1 // loop_body
      %s29 = ssub.s32 %s24, 1
      %s30 = ssub.s32 %s24, 2
      %s31 = sadd.s32 %s24, 1
      %s32 = ssub.s32 %s24, %s31
      %p33 = scmp.eq.s32.totalorder %s32, 0
      %s35 = sadd.s32 %s34, 1
      %s36 = scalar_select %p33, %s34, %s35
      %p39 = pneg %p33
      %p40 = scmp.eq.s32.totalorder %s24, 1
      %p41 = por %p39, %p40
      %p42 = scmp.ne.s32.totalorder %s34, %s37
      %p43 = scmp.eq.s32.totalorder %s24, 0
      %p44 = por %p42, %p43
      %p45 = scmp.ne.s32.totalorder %s34, %s37
      %p46 = scmp.eq.s32.totalorder %s29, 1
      %p47 = por %p45, %p46
      %p48 = scmp.ne.s32.totalorder %s37, %s38
      %p49 = scmp.eq.s32.totalorder %s29, 0
      %p50 = por %p48, %p49
      %p51 = scmp.ne.s32.totalorder %s37, %s38
      %p52 = scmp.eq.s32.totalorder %s30, 1
      %p53 = por %p51, %p52
      %p55 = scmp.ne.s32.totalorder %s38, %s54
      %p56 = scmp.eq.s32.totalorder %s30, 0
      %p57 = por %p55, %p56
      %s59 = sadd.s32 %s58, 1
      %p62 = scmp.eq.s32.totalorder %s24, 1
      %p63 = scmp.ne.s32.totalorder %s58, %s60
      %p64 = scmp.eq.s32.totalorder %s24, 0
      %p65 = por %p63, %p64
      %p66 = scmp.ne.s32.totalorder %s58, %s60
      %p67 = scmp.eq.s32.totalorder %s29, 1
      %p68 = por %p66, %p67
      %p69 = scmp.ne.s32.totalorder %s60, %s61
      %p70 = scmp.eq.s32.totalorder %s29, 0
      %p71 = por %p69, %p70
      %p72 = scmp.ne.s32.totalorder %s60, %s61
      %p73 = scmp.eq.s32.totalorder %s30, 1
      %p74 = por %p72, %p73
      %p76 = scmp.ne.s32.totalorder %s61, %s75
      %p77 = scmp.eq.s32.totalorder %s30, 0
      %p78 = por %p76, %p77
      %s80 = sadd.s32 %s79, 1
      %p83 = scmp.eq.s32.totalorder %s24, 1
      %p84 = scmp.ne.s32.totalorder %s79, %s81
      %p85 = scmp.eq.s32.totalorder %s24, 0
      %p86 = por %p84, %p85
      %p87 = scmp.ne.s32.totalorder %s79, %s81
      %p88 = scmp.eq.s32.totalorder %s29, 1
      %p89 = por %p87, %p88
      %p90 = scmp.ne.s32.totalorder %s81, %s82
      %p91 = scmp.eq.s32.totalorder %s29, 0
      %p92 = por %p90, %p91
      %p93 = scmp.ne.s32.totalorder %s81, %s82
      %p94 = scmp.eq.s32.totalorder %s30, 1
      %p95 = por %p93, %p94
      %p97 = scmp.ne.s32.totalorder %s82, %s96
      %p98 = scmp.eq.s32.totalorder %s30, 0
      %p99 = por %p97, %p98
      %s101 = sadd.s32 %s100, 1
      %p104 = scmp.eq.s32.totalorder %s24, 1
      %p105 = scmp.ne.s32.totalorder %s100, %s102
      %p106 = scmp.eq.s32.totalorder %s24, 0
      %p107 = por %p105, %p106
      %p108 = scmp.ne.s32.totalorder %s100, %s102
      %p109 = scmp.eq.s32.totalorder %s29, 1
      %p110 = por %p108, %p109
      %p111 = scmp.ne.s32.totalorder %s102, %s103
      %p112 = scmp.eq.s32.totalorder %s29, 0
      %p113 = por %p111, %p112
      %p114 = scmp.ne.s32.totalorder %s102, %s103
      %p115 = scmp.eq.s32.totalorder %s30, 1
      %p116 = por %p114, %p115
      %p118 = scmp.ne.s32.totalorder %s103, %s117
      %p119 = scmp.eq.s32.totalorder %s30, 0
      %p120 = por %p118, %p119
      %s122 = sadd.s32 %s121, 1
      %p125 = scmp.eq.s32.totalorder %s24, 1
      %p126 = scmp.ne.s32.totalorder %s121, %s123
      %p127 = scmp.eq.s32.totalorder %s24, 0
      %p128 = por %p126, %p127
      %p129 = scmp.ne.s32.totalorder %s121, %s123
      %p130 = scmp.eq.s32.totalorder %s29, 1
      %p131 = por %p129, %p130
      %p132 = scmp.ne.s32.totalorder %s123, %s124
      %p133 = scmp.eq.s32.totalorder %s29, 0
      %p134 = por %p132, %p133
      %p135 = scmp.ne.s32.totalorder %s123, %s124
      %p136 = scmp.eq.s32.totalorder %s30, 1
      %p137 = por %p135, %p136
      %p139 = scmp.ne.s32.totalorder %s124, %s138
      %p140 = scmp.eq.s32.totalorder %s30, 0
      %p141 = por %p139, %p140
      %s143 = sadd.s32 %s142, 1
      %p146 = scmp.eq.s32.totalorder %s24, 1
      %p147 = scmp.ne.s32.totalorder %s142, %s144
      %p148 = scmp.eq.s32.totalorder %s24, 0
      %p149 = por %p147, %p148
      %p150 = scmp.ne.s32.totalorder %s142, %s144
      %p151 = scmp.eq.s32.totalorder %s29, 1
      %p152 = por %p150, %p151
      %p153 = scmp.ne.s32.totalorder %s144, %s145
      %p154 = scmp.eq.s32.totalorder %s29, 0
      %p155 = por %p153, %p154
      %p156 = scmp.ne.s32.totalorder %s144, %s145
      %p157 = scmp.eq.s32.totalorder %s30, 1
      %p158 = por %p156, %p157
      %p160 = scmp.ne.s32.totalorder %s145, %s159
      %p161 = scmp.eq.s32.totalorder %s30, 0
      %p162 = por %p160, %p161
      %s164 = sadd.s32 %s163, 1
      %p167 = scmp.eq.s32.totalorder %s24, 1
      %p168 = scmp.ne.s32.totalorder %s163, %s165
      %p169 = scmp.eq.s32.totalorder %s24, 0
      %p170 = por %p168, %p169
      %p171 = scmp.ne.s32.totalorder %s163, %s165
      %p172 = scmp.eq.s32.totalorder %s29, 1
      %p173 = por %p171, %p172
      %p174 = scmp.ne.s32.totalorder %s165, %s166
      %p175 = scmp.eq.s32.totalorder %s29, 0
      %p176 = por %p174, %p175
      %p177 = scmp.ne.s32.totalorder %s165, %s166
      %p178 = scmp.eq.s32.totalorder %s30, 1
      %p179 = por %p177, %p178
      %p181 = scmp.ne.s32.totalorder %s166, %s180
      %p182 = scmp.eq.s32.totalorder %s30, 0
      %p183 = por %p181, %p182
      %s185 = sadd.s32 %s184, 1
      %p188 = scmp.eq.s32.totalorder %s24, 1
      %p189 = scmp.ne.s32.totalorder %s184, %s186
      %p190 = scmp.eq.s32.totalorder %s24, 0
      %p191 = por %p189, %p190
      %p192 = scmp.ne.s32.totalorder %s184, %s186
      %p193 = scmp.eq.s32.totalorder %s29, 1
      %p194 = por %p192, %p193
      %p195 = scmp.ne.s32.totalorder %s186, %s187
      %p196 = scmp.eq.s32.totalorder %s29, 0
      %p197 = por %p195, %p196
      %p198 = scmp.ne.s32.totalorder %s186, %s187
      %p199 = scmp.eq.s32.totalorder %s30, 1
      %p200 = por %p198, %p199
      %p202 = scmp.ne.s32.totalorder %s187, %s201
      %p203 = scmp.eq.s32.totalorder %s30, 0
      %p204 = por %p202, %p203
      %s206 = sadd.s32 %s205, 1
      %p209 = scmp.eq.s32.totalorder %s24, 1
      %p210 = scmp.ne.s32.totalorder %s205, %s207
      %p211 = scmp.eq.s32.totalorder %s24, 0
      %p212 = por %p210, %p211
      %p213 = scmp.ne.s32.totalorder %s205, %s207
      %p214 = scmp.eq.s32.totalorder %s29, 1
      %p215 = por %p213, %p214
      %p216 = scmp.ne.s32.totalorder %s207, %s208
      %p217 = scmp.eq.s32.totalorder %s29, 0
      %p218 = por %p216, %p217
      %p219 = scmp.ne.s32.totalorder %s207, %s208
      %p220 = scmp.eq.s32.totalorder %s30, 1
      %p221 = por %p219, %p220
      %p223 = scmp.ne.s32.totalorder %s208, %s222
      %p224 = scmp.eq.s32.totalorder %s30, 0
      %p225 = por %p223, %p224
      %s226 = ssub.s32 %s24, %s31
      %p227 = scmp.eq.s32.totalorder %s226, 0
      %s229 = sadd.s32 %s228, 1
      %s230 = scalar_select %p227, %s228, %s229
      %p233 = pneg %p227
      %p234 = scmp.eq.s32.totalorder %s24, 1
      %p235 = por %p233, %p234
      %p236 = scmp.ne.s32.totalorder %s228, %s231
      %p237 = scmp.eq.s32.totalorder %s24, 0
      %p238 = por %p236, %p237
      %p239 = scmp.ne.s32.totalorder %s228, %s231
      %p240 = scmp.eq.s32.totalorder %s29, 1
      %p241 = por %p239, %p240
      %p242 = scmp.ne.s32.totalorder %s231, %s232
      %p243 = scmp.eq.s32.totalorder %s29, 0
      %p244 = por %p242, %p243
      %p245 = scmp.ne.s32.totalorder %s231, %s232
      %p246 = scmp.eq.s32.totalorder %s30, 1
      %p247 = por %p245, %p246
      %p249 = scmp.ne.s32.totalorder %s232, %s248
      %p250 = scmp.eq.s32.totalorder %s30, 0
      %p251 = por %p249, %p250
      %p252 = scmp.le.s32.totalorder 1, %s24
      %p253 = scmp.lt.s32.totalorder %s24, 3
      %p254 = pnand %p252, %p253
      %p255 = pneg %p254
      // Predicated region
      $region9: #{tpu_custom_call.1} parent=5 // pred_check
        _
      $region10: #{tpu_custom_call.1} parent=5 // pred_check_branch
        %257 = sbr.rel (%p254) target = $region12
      $region11: #{tpu_custom_call.1} parent=5 // pred_region
        %s258 = ssub.s32 %s24, 1
        // Predicated region
        $region13: #{tpu_custom_call.1} parent=11 // pred_check
          %p259 = pneg %p71
        $region14: #{tpu_custom_call.1} parent=11 // pred_check_branch
          %261 = sbr.rel (%p259) target = $region16
        $region15: #{tpu_custom_call.1} parent=11 // pred_region
          %263 = vsyncadd [#allocation7], 0
          %s264 = sshll.u32 %s1, 4
          %s265 = int_to_ptr.hbm [resolvable:$true] %s264
          %s266 = sshll.u32 [#allocation6], 4
          %s267 = int_to_ptr.vmem [resolvable:$true] %s266
          %272 = dma.hbm_to_vmem [thread:$0]  %s265, 18432, %s267, [#allocation7], 128, 128, 8
        $region16: #{tpu_custom_call.1} parent=11 // pred_fallthru
          _
        // Predicated region
        $region17: #{tpu_custom_call.1} parent=11 // pred_check
          %p273 = pneg %p92
        $region18: #{tpu_custom_call.1} parent=11 // pred_check_branch
          %275 = sbr.rel (%p273) target = $region20
        $region19: #{tpu_custom_call.1} parent=11 // pred_region
          %277 = vsyncadd [#allocation7], 0
          %s278 = sshll.u32 %s2, 4
          %s279 = int_to_ptr.hbm [resolvable:$true] %s278
          %s280 = sshll.u32 [#allocation8], 4
          %s281 = int_to_ptr.vmem [resolvable:$true] %s280
          %286 = dma.hbm_to_vmem [thread:$0]  %s279, 48, %s281, [#allocation7], 16, 16, 1
        $region20: #{tpu_custom_call.1} parent=11 // pred_fallthru
          _
        // Predicated region
        $region21: #{tpu_custom_call.1} parent=11 // pred_check
          %p287 = pneg %p113
        $region22: #{tpu_custom_call.1} parent=11 // pred_check_branch
          %289 = sbr.rel (%p287) target = $region24
        $region23: #{tpu_custom_call.1} parent=11 // pred_region
          %291 = vsyncadd [#allocation10], 0
          %s292 = sshll.u32 %s3, 4
          %s293 = int_to_ptr.hbm [resolvable:$true] %s292
          %s294 = sshll.u32 [#allocation9], 4
          %s295 = int_to_ptr.vmem [resolvable:$true] %s294
          %300 = dma.hbm_to_vmem [thread:$0]  %s293, 18432, %s295, [#allocation10], 128, 128, 8
        $region24: #{tpu_custom_call.1} parent=11 // pred_fallthru
          _
        // Predicated region
        $region25: #{tpu_custom_call.1} parent=11 // pred_check
          %p301 = pneg %p134
        $region26: #{tpu_custom_call.1} parent=11 // pred_check_branch
          %303 = sbr.rel (%p301) target = $region28
        $region27: #{tpu_custom_call.1} parent=11 // pred_region
          _
        $region28: #{tpu_custom_call.1} parent=11 // pred_fallthru
          _
        // Predicated region
        $region29: #{tpu_custom_call.1} parent=11 // pred_check
          %p304 = pneg %p155
        $region30: #{tpu_custom_call.1} parent=11 // pred_check_branch
          %306 = sbr.rel (%p304) target = $region32
        $region31: #{tpu_custom_call.1} parent=11 // pred_region
          %308 = vsyncadd [#allocation10], 0
          %s309 = sshll.u32 %s5, 4
          %s310 = int_to_ptr.hbm [resolvable:$true] %s309
          %s311 = sshll.u32 [#allocation11], 4
          %s312 = int_to_ptr.vmem [resolvable:$true] %s311
          %317 = dma.hbm_to_vmem [thread:$0]  %s310, 4096, %s312, [#allocation10], 128, 128, 8
        $region32: #{tpu_custom_call.1} parent=11 // pred_fallthru
          _
        // Predicated region
        $region33: #{tpu_custom_call.1} parent=11 // pred_check
          %p318 = pneg %p176
        $region34: #{tpu_custom_call.1} parent=11 // pred_check_branch
          %320 = sbr.rel (%p318) target = $region36
        $region35: #{tpu_custom_call.1} parent=11 // pred_region
          _
        $region36: #{tpu_custom_call.1} parent=11 // pred_fallthru
          _
        // Predicated region
        $region37: #{tpu_custom_call.1} parent=11 // pred_check
          %p321 = pneg %p197
        $region38: #{tpu_custom_call.1} parent=11 // pred_check_branch
          %323 = sbr.rel (%p321) target = $region40
        $region39: #{tpu_custom_call.1} parent=11 // pred_region
          %325 = vsyncadd [#allocation13], 0
          %s326 = sshll.u32 %s7, 4
          %s327 = int_to_ptr.hbm [resolvable:$true] %s326
          %s328 = sshll.u32 [#allocation12], 4
          %s329 = int_to_ptr.vmem [resolvable:$true] %s328
          %334 = dma.hbm_to_vmem [thread:$0]  %s327, 2048, %s329, [#allocation13], 128, 128, 8
        $region40: #{tpu_custom_call.1} parent=11 // pred_fallthru
          _
        // Predicated region
        $region41: #{tpu_custom_call.1} parent=11 // pred_check
          %p335 = pneg %p218
        $region42: #{tpu_custom_call.1} parent=11 // pred_check_branch
          %337 = sbr.rel (%p335) target = $region44
        $region43: #{tpu_custom_call.1} parent=11 // pred_region
          _
        $region44: #{tpu_custom_call.1} parent=11 // pred_fallthru
          _
      $region12: #{tpu_custom_call.1} parent=5 // pred_fallthru
        _
      %p338 = scmp.lt.s32.totalorder %s24, 2
      // Predicated region
      $region45: #{tpu_custom_call.1} parent=5 // pred_check
        %p339 = pneg %p338
      $region46: #{tpu_custom_call.1} parent=5 // pred_check_branch
        %341 = sbr.rel (%p339) target = $region48
      $region47: #{tpu_custom_call.1} parent=5 // pred_region
        // Predicated region
        $region49: #{tpu_custom_call.1} parent=47 // pred_check
          %p342 = pneg %p44
        $region50: #{tpu_custom_call.1} parent=47 // pred_check_branch
          %344 = sbr.rel (%p342) target = $region52
        $region51: #{tpu_custom_call.1} parent=47 // pred_region
          %s345 = sand.u32 %s34, 1
          %s346 = scalar_lea.sflag [#allocation4], %s345
          %s347 = sand.u32 %s34, 1
          %s348 = smul.addr %s347, 16
          %s349 = scalar_lea.vmem [#allocation3], %s348
          %351 = vsyncadd %s346, 0
          %s352 = smul.addr %s24, 2
          %s353 = smul.addr %s352, 8
          %s354 = scalar_lea.hbm %s0, %s353
          %s355 = sshll.u32 %s354, 4
          %s356 = int_to_ptr.hbm [resolvable:$true] %s355
          %s357 = sshll.u32 %s349, 4
          %s358 = int_to_ptr.vmem [resolvable:$true] %s357
          %363 = dma.hbm_to_vmem [thread:$0]  %s356, 256, %s358, %s346, 128, 128, 8
        $region52: #{tpu_custom_call.1} parent=47 // pred_fallthru
          _
      $region48: #{tpu_custom_call.1} parent=5 // pred_fallthru
        _
      %p364 = scmp.le.s32.totalorder 1, %s24
      %p365 = scmp.lt.s32.totalorder %s24, 3
      %p366 = pnand %p364, %p365
      %p367 = pneg %p366
      // Predicated region
      $region53: #{tpu_custom_call.1} parent=5 // pred_check
        _
      $region54: #{tpu_custom_call.1} parent=5 // pred_check_branch
        %369 = sbr.rel (%p366) target = $region56
      $region55: #{tpu_custom_call.1} parent=5 // pred_region
        %s370 = ssub.s32 %s24, 1
        %s371 = sand.u32 %s37, 1
        %s372 = scalar_lea.sflag [#allocation4], %s371
        %s373 = sand.u32 %s37, 1
        %s374 = smul.addr %s373, 16
        %s375 = scalar_lea.vmem [#allocation3], %s374
        // Predicated region
        $region57: #{tpu_custom_call.1} parent=55 // pred_check
          %p376 = pneg %p50
        $region58: #{tpu_custom_call.1} parent=55 // pred_check_branch
          %378 = sbr.rel (%p376) target = $region60
        $region59: #{tpu_custom_call.1} parent=55 // pred_region
          %380 = dma.done %s372, 256
        $region60: #{tpu_custom_call.1} parent=55 // pred_fallthru
          _
        // Predicated region
        $region61: #{tpu_custom_call.1} parent=55 // pred_check
          %p381 = pneg %p71
        $region62: #{tpu_custom_call.1} parent=55 // pred_check_branch
          %383 = sbr.rel (%p381) target = $region64
        $region63: #{tpu_custom_call.1} parent=55 // pred_region
          %385 = dma.done [#allocation7], 18432
        $region64: #{tpu_custom_call.1} parent=55 // pred_fallthru
          _
        // Predicated region
        $region65: #{tpu_custom_call.1} parent=55 // pred_check
          %p386 = pneg %p92
        $region66: #{tpu_custom_call.1} parent=55 // pred_check_branch
          %388 = sbr.rel (%p386) target = $region68
        $region67: #{tpu_custom_call.1} parent=55 // pred_region
          %390 = dma.done [#allocation7], 48
        $region68: #{tpu_custom_call.1} parent=55 // pred_fallthru
          _
        // Predicated region
        $region69: #{tpu_custom_call.1} parent=55 // pred_check
          %p391 = pneg %p113
        $region70: #{tpu_custom_call.1} parent=55 // pred_check_branch
          %393 = sbr.rel (%p391) target = $region72
        $region71: #{tpu_custom_call.1} parent=55 // pred_region
          %395 = dma.done [#allocation10], 18432
        $region72: #{tpu_custom_call.1} parent=55 // pred_fallthru
          _
        // Predicated region
        $region73: #{tpu_custom_call.1} parent=55 // pred_check
          %p396 = pneg %p155
        $region74: #{tpu_custom_call.1} parent=55 // pred_check_branch
          %398 = sbr.rel (%p396) target = $region76
        $region75: #{tpu_custom_call.1} parent=55 // pred_region
          %400 = dma.done [#allocation10], 4096
        $region76: #{tpu_custom_call.1} parent=55 // pred_fallthru
          _
        // Predicated region
        $region77: #{tpu_custom_call.1} parent=55 // pred_check
          %p401 = pneg %p197
        $region78: #{tpu_custom_call.1} parent=55 // pred_check_branch
          %403 = sbr.rel (%p401) target = $region80
        $region79: #{tpu_custom_call.1} parent=55 // pred_region
          %405 = dma.done [#allocation13], 2048
        $region80: #{tpu_custom_call.1} parent=55 // pred_fallthru
          _
        %s406 = sand.u32 %s37, 1
        %s407 = scalar_lea.sflag [#allocation4], %s406
        %s408 = sand.u32 %s37, 1
        %s409 = smul.addr %s408, 16
        %s410 = scalar_lea.vmem [#allocation3], %s409
        %p411 = pneg %p50
        %p412 = pneg %p47
        %p413 = pneg %p71
        %p414 = pneg %p68
        %p415 = pneg %p92
        %p416 = pneg %p89
        %p417 = pneg %p113
        %p418 = pneg %p110
        %p419 = pneg %p134
        %p420 = pneg %p131
        %p421 = pneg %p155
        %p422 = pneg %p152
        %p423 = pneg %p176
        %p424 = pneg %p173
        %p425 = pneg %p197
        %p426 = pneg %p194
        %p427 = pneg %p218
        %p428 = pneg %p215
        %p429 = pneg %p244
        %p430 = pneg %p241
        %s431 = sand.u32 %s231, 1
        %s432 = scalar_lea.sflag [#allocation5], %s431
        %s433 = sand.u32 %s231, 1
        %s434 = scalar_lea.vmem [#allocation14], %s433
        %435 = vst [vmem:[#allocation2] sm:$0xff] 0.0
        %v436 = vld [vmem:[%s375] sm:$0xff]
        %v437 = vld [vmem:[%s375 + $0x8] sm:$0xff]
        %438 = vst [vmem:[#allocation2 + $0x8] sm:$0xff] %v436
        %439 = vst [vmem:[#allocation2 + $0x10] sm:$0xff] %v437
        %v440 = vld [vmem:[#allocation2 + $0x8] sm:$0xff]
        %v441 = vld [vmem:[#allocation2 + $0x10] sm:$0xff]
        %v442 = vld [vmem:[#allocation2 + $0x6] sm:$0xff]
        %v443 = vld [vmem:[#allocation2 + $0xe] sm:$0xff]
        %v444 = vld [vmem:[#allocation2 + $0x7] sm:$0xff]
        %v445 = vld [vmem:[#allocation2 + $0xf] sm:$0xff]
        %v446 = vld [vmem:[#allocation6] sm:$0xff]
        %v447 = vld [vmem:[#allocation6 + $0x8] sm:$0xff]
        %v448 = vld [vmem:[#allocation6 + $0x10] sm:$0xff]
        %v449 = vld [vmem:[#allocation6 + $0x18] sm:$0xff]
        %v450 = vld [vmem:[#allocation6 + $0x20] sm:$0xff]
        %v451 = vld [vmem:[#allocation6 + $0x28] sm:$0xff]
        %v452 = vld [vmem:[#allocation6 + $0x30] sm:$0xff]
        %v453 = vld [vmem:[#allocation6 + $0x38] sm:$0xff]
        %v454 = vld [vmem:[#allocation6 + $0x40] sm:$0xff]
        %v455 = vld [vmem:[#allocation6 + $0x48] sm:$0xff]
        %v456 = vld [vmem:[#allocation6 + $0x50] sm:$0xff]
        %v457 = vld [vmem:[#allocation6 + $0x58] sm:$0xff]
        %v458 = vld [vmem:[#allocation6 + $0x60] sm:$0xff]
        %v459 = vld [vmem:[#allocation6 + $0x68] sm:$0xff]
        %v460 = vld [vmem:[#allocation6 + $0x70] sm:$0xff]
        %v461 = vld [vmem:[#allocation6 + $0x78] sm:$0xff]
        %v462 = vld [vmem:[#allocation6 + $0x80] sm:$0xff]
        %v463 = vld [vmem:[#allocation6 + $0x88] sm:$0xff]
        %v464 = vld [vmem:[#allocation6 + $0x90] sm:$0xff]
        %v465 = vld [vmem:[#allocation6 + $0x98] sm:$0xff]
        %v466 = vld [vmem:[#allocation6 + $0xa0] sm:$0xff]
        %v467 = vld [vmem:[#allocation6 + $0xa8] sm:$0xff]
        %v468 = vld [vmem:[#allocation6 + $0xb0] sm:$0xff]
        %v469 = vld [vmem:[#allocation6 + $0xb8] sm:$0xff]
        %v470 = vld [vmem:[#allocation6 + $0xc0] sm:$0xff]
        %v471 = vld [vmem:[#allocation6 + $0xc8] sm:$0xff]
        %v472 = vld [vmem:[#allocation6 + $0xd0] sm:$0xff]
        %v473 = vld [vmem:[#allocation6 + $0xd8] sm:$0xff]
        %v474 = vld [vmem:[#allocation6 + $0xe0] sm:$0xff]
        %v475 = vld [vmem:[#allocation6 + $0xe8] sm:$0xff]
        %v476 = vld [vmem:[#allocation6 + $0xf0] sm:$0xff]
        %v477 = vld [vmem:[#allocation6 + $0xf8] sm:$0xff]
        %v478 = vld [vmem:[#allocation6 + $0x100] sm:$0xff]
        %v479 = vld [vmem:[#allocation6 + $0x108] sm:$0xff]
        %v480 = vld [vmem:[#allocation6 + $0x110] sm:$0xff]
        %v481 = vld [vmem:[#allocation6 + $0x118] sm:$0xff]
        %v482 = vld [vmem:[#allocation6 + $0x120] sm:$0xff]
        %v483 = vld [vmem:[#allocation6 + $0x128] sm:$0xff]
        %v484 = vld [vmem:[#allocation6 + $0x130] sm:$0xff]
        %v485 = vld [vmem:[#allocation6 + $0x138] sm:$0xff]
        %v486 = vld [vmem:[#allocation6 + $0x140] sm:$0xff]
        %v487 = vld [vmem:[#allocation6 + $0x148] sm:$0xff]
        %v488 = vld [vmem:[#allocation6 + $0x150] sm:$0xff]
        %v489 = vld [vmem:[#allocation6 + $0x158] sm:$0xff]
        %v490 = vld [vmem:[#allocation6 + $0x160] sm:$0xff]
        %v491 = vld [vmem:[#allocation6 + $0x168] sm:$0xff]
        %v492 = vld [vmem:[#allocation6 + $0x170] sm:$0xff]
        %v493 = vld [vmem:[#allocation6 + $0x178] sm:$0xff]
        %v494 = vld [vmem:[#allocation8] sm:$0x1]
        %v496 = vperm.slane %v494, 0
        %498 = vmatpush.msra.mxu0 %v461
        %499 = vmatpush.msra.mxu0 %v460
        %500 = vmatpush.msra.mxu0 %v459
        %501 = vmatpush.msra.mxu0 %v458
        %502 = vmatpush.msra.mxu0 %v457
        %503 = vmatpush.msra.mxu0 %v456
        %504 = vmatpush.msra.mxu0 %v455
        %505 = vmatpush.msra.mxu0 %v454
        %506 = vmatpush.msra.mxu0 %v453
        %507 = vmatpush.msra.mxu0 %v452
        %508 = vmatpush.msra.mxu0 %v451
        %509 = vmatpush.msra.mxu0 %v450
        %510 = vmatpush.msra.mxu0 %v449
        %511 = vmatpush.msra.mxu0 %v448
        %512 = vmatpush.msra.mxu0 %v447
        %513 = vmatpush.msra.mxu0 %v446
        %514 = vmatmul.f32.gmra.mxu0 %v442
        %v515 = vpop.f32.mrf.mxu0
        %v516 = vadd.f32 %v496, %v515
        %517 = vmatmul.f32.gmra.mxu0 %v443
        %v518 = vpop.f32.mrf.mxu0
        %v519 = vadd.f32 %v496, %v518
        %520 = vdwg.mxu0
        %521 = vmatpush.msra.mxu0 %v477
        %522 = vmatpush.msra.mxu0 %v476
        %523 = vmatpush.msra.mxu0 %v475
        %524 = vmatpush.msra.mxu0 %v474
        %525 = vmatpush.msra.mxu0 %v473
        %526 = vmatpush.msra.mxu0 %v472
        %527 = vmatpush.msra.mxu0 %v471
        %528 = vmatpush.msra.mxu0 %v470
        %529 = vmatpush.msra.mxu0 %v469
        %530 = vmatpush.msra.mxu0 %v468
        %531 = vmatpush.msra.mxu0 %v467
        %532 = vmatpush.msra.mxu0 %v466
        %533 = vmatpush.msra.mxu0 %v465
        %534 = vmatpush.msra.mxu0 %v464
        %535 = vmatpush.msra.mxu0 %v463
        %536 = vmatpush.msra.mxu0 %v462
        %537 = vmatmul.f32.gmra.mxu0 %v444
        %v538 = vpop.f32.mrf.mxu0
        %v539 = vadd.f32 %v516, %v538
        %540 = vmatmul.f32.gmra.mxu0 %v445
        %v541 = vpop.f32.mrf.mxu0
        %v542 = vadd.f32 %v519, %v541
        %543 = vdwg.mxu0
        %544 = vmatpush.msra.mxu0 %v493
        %545 = vmatpush.msra.mxu0 %v492
        %546 = vmatpush.msra.mxu0 %v491
        %547 = vmatpush.msra.mxu0 %v490
        %548 = vmatpush.msra.mxu0 %v489
        %549 = vmatpush.msra.mxu0 %v488
        %550 = vmatpush.msra.mxu0 %v487
        %551 = vmatpush.msra.mxu0 %v486
        %552 = vmatpush.msra.mxu0 %v485
        %553 = vmatpush.msra.mxu0 %v484
        %554 = vmatpush.msra.mxu0 %v483
        %555 = vmatpush.msra.mxu0 %v482
        %556 = vmatpush.msra.mxu0 %v481
        %557 = vmatpush.msra.mxu0 %v480
        %558 = vmatpush.msra.mxu0 %v479
        %559 = vmatpush.msra.mxu0 %v478
        %560 = vmatmul.f32.gmra.mxu0 %v440
        %v561 = vpop.f32.mrf.mxu0
        %v562 = vadd.f32 %v539, %v561
        %563 = vmatmul.f32.gmra.mxu0 %v441
        %v564 = vpop.f32.mrf.mxu0
        %v565 = vadd.f32 %v542, %v564
        %566 = vdwg.mxu0
        %v567 = vmax.f32 %v562, 0.0
        %v568 = vmax.f32 %v565, 0.0
        %569 = vst [vmem:[#allocation2 + $0x8] sm:$0xff] %v567
        %570 = vst [vmem:[#allocation2 + $0x10] sm:$0xff] %v568
        %v571 = vld [vmem:[#allocation2 + $0x6] sm:$0xff]
        %v572 = vld [vmem:[#allocation2 + $0xe] sm:$0xff]
        %v573 = vld [vmem:[#allocation2 + $0x7] sm:$0xff]
        %v574 = vld [vmem:[#allocation2 + $0xf] sm:$0xff]
        %v575 = vld [vmem:[#allocation2 + $0x8] sm:$0xff]
        %v576 = vld [vmem:[#allocation2 + $0x10] sm:$0xff]
        %v577 = vld [vmem:[#allocation9] sm:$0xff]
        %v578 = vld [vmem:[#allocation9 + $0x8] sm:$0xff]
        %v579 = vld [vmem:[#allocation9 + $0x10] sm:$0xff]
        %v580 = vld [vmem:[#allocation9 + $0x18] sm:$0xff]
        %v581 = vld [vmem:[#allocation9 + $0x20] sm:$0xff]
        %v582 = vld [vmem:[#allocation9 + $0x28] sm:$0xff]
        %v583 = vld [vmem:[#allocation9 + $0x30] sm:$0xff]
        %v584 = vld [vmem:[#allocation9 + $0x38] sm:$0xff]
        %v585 = vld [vmem:[#allocation9 + $0x40] sm:$0xff]
        %v586 = vld [vmem:[#allocation9 + $0x48] sm:$0xff]
        %v587 = vld [vmem:[#allocation9 + $0x50] sm:$0xff]
        %v588 = vld [vmem:[#allocation9 + $0x58] sm:$0xff]
        %v589 = vld [vmem:[#allocation9 + $0x60] sm:$0xff]
        %v590 = vld [vmem:[#allocation9 + $0x68] sm:$0xff]
        %v591 = vld [vmem:[#allocation9 + $0x70] sm:$0xff]
        %v592 = vld [vmem:[#allocation9 + $0x78] sm:$0xff]
        %v593 = vld [vmem:[#allocation9 + $0x80] sm:$0xff]
        %v594 = vld [vmem:[#allocation9 + $0x88] sm:$0xff]
        %v595 = vld [vmem:[#allocation9 + $0x90] sm:$0xff]
        %v596 = vld [vmem:[#allocation9 + $0x98] sm:$0xff]
        %v597 = vld [vmem:[#allocation9 + $0xa0] sm:$0xff]
        %v598 = vld [vmem:[#allocation9 + $0xa8] sm:$0xff]
        %v599 = vld [vmem:[#allocation9 + $0xb0] sm:$0xff]
        %v600 = vld [vmem:[#allocation9 + $0xb8] sm:$0xff]
        %v601 = vld [vmem:[#allocation9 + $0xc0] sm:$0xff]
        %v602 = vld [vmem:[#allocation9 + $0xc8] sm:$0xff]
        %v603 = vld [vmem:[#allocation9 + $0xd0] sm:$0xff]
        %v604 = vld [vmem:[#allocation9 + $0xd8] sm:$0xff]
        %v605 = vld [vmem:[#allocation9 + $0xe0] sm:$0xff]
        %v606 = vld [vmem:[#allocation9 + $0xe8] sm:$0xff]
        %v607 = vld [vmem:[#allocation9 + $0xf0] sm:$0xff]
        %v608 = vld [vmem:[#allocation9 + $0xf8] sm:$0xff]
        %v609 = vld [vmem:[#allocation9 + $0x100] sm:$0xff]
        %v610 = vld [vmem:[#allocation9 + $0x108] sm:$0xff]
        %v611 = vld [vmem:[#allocation9 + $0x110] sm:$0xff]
        %v612 = vld [vmem:[#allocation9 + $0x118] sm:$0xff]
        %v613 = vld [vmem:[#allocation9 + $0x120] sm:$0xff]
        %v614 = vld [vmem:[#allocation9 + $0x128] sm:$0xff]
        %v615 = vld [vmem:[#allocation9 + $0x130] sm:$0xff]
        %v616 = vld [vmem:[#allocation9 + $0x138] sm:$0xff]
        %v617 = vld [vmem:[#allocation9 + $0x140] sm:$0xff]
        %v618 = vld [vmem:[#allocation9 + $0x148] sm:$0xff]
        %v619 = vld [vmem:[#allocation9 + $0x150] sm:$0xff]
        %v620 = vld [vmem:[#allocation9 + $0x158] sm:$0xff]
        %v621 = vld [vmem:[#allocation9 + $0x160] sm:$0xff]
        %v622 = vld [vmem:[#allocation9 + $0x168] sm:$0xff]
        %v623 = vld [vmem:[#allocation9 + $0x170] sm:$0xff]
        %v624 = vld [vmem:[#allocation9 + $0x178] sm:$0xff]
        %v625 = vld [vmem:[%s4] sm:$0x1]
        %v627 = vperm.slane %v625, 0
        %629 = vmatpush.msra.mxu0 %v592
        %630 = vmatpush.msra.mxu0 %v591
        %631 = vmatpush.msra.mxu0 %v590
        %632 = vmatpush.msra.mxu0 %v589
        %633 = vmatpush.msra.mxu0 %v588
        %634 = vmatpush.msra.mxu0 %v587
        %635 = vmatpush.msra.mxu0 %v586
        %636 = vmatpush.msra.mxu0 %v585
        %637 = vmatpush.msra.mxu0 %v584
        %638 = vmatpush.msra.mxu0 %v583
        %639 = vmatpush.msra.mxu0 %v582
        %640 = vmatpush.msra.mxu0 %v581
        %641 = vmatpush.msra.mxu0 %v580
        %642 = vmatpush.msra.mxu0 %v579
        %643 = vmatpush.msra.mxu0 %v578
        %644 = vmatpush.msra.mxu0 %v577
        %645 = vmatmul.f32.gmra.mxu0 %v571
        %v646 = vpop.f32.mrf.mxu0
        %v647 = vadd.f32 %v627, %v646
        %648 = vmatmul.f32.gmra.mxu0 %v572
        %v649 = vpop.f32.mrf.mxu0
        %v650 = vadd.f32 %v627, %v649
        %651 = vdwg.mxu0
        %652 = vmatpush.msra.mxu0 %v608
        %653 = vmatpush.msra.mxu0 %v607
        %654 = vmatpush.msra.mxu0 %v606
        %655 = vmatpush.msra.mxu0 %v605
        %656 = vmatpush.msra.mxu0 %v604
        %657 = vmatpush.msra.mxu0 %v603
        %658 = vmatpush.msra.mxu0 %v602
        %659 = vmatpush.msra.mxu0 %v601
        %660 = vmatpush.msra.mxu0 %v600
        %661 = vmatpush.msra.mxu0 %v599
        %662 = vmatpush.msra.mxu0 %v598
        %663 = vmatpush.msra.mxu0 %v597
        %664 = vmatpush.msra.mxu0 %v596
        %665 = vmatpush.msra.mxu0 %v595
        %666 = vmatpush.msra.mxu0 %v594
        %667 = vmatpush.msra.mxu0 %v593
        %668 = vmatmul.f32.gmra.mxu0 %v573
        %v669 = vpop.f32.mrf.mxu0
        %v670 = vadd.f32 %v647, %v669
        %671 = vmatmul.f32.gmra.mxu0 %v574
        %v672 = vpop.f32.mrf.mxu0
        %v673 = vadd.f32 %v650, %v672
        %674 = vdwg.mxu0
        %675 = vmatpush.msra.mxu0 %v624
        %676 = vmatpush.msra.mxu0 %v623
        %677 = vmatpush.msra.mxu0 %v622
        %678 = vmatpush.msra.mxu0 %v621
        %679 = vmatpush.msra.mxu0 %v620
        %680 = vmatpush.msra.mxu0 %v619
        %681 = vmatpush.msra.mxu0 %v618
        %682 = vmatpush.msra.mxu0 %v617
        %683 = vmatpush.msra.mxu0 %v616
        %684 = vmatpush.msra.mxu0 %v615
        %685 = vmatpush.msra.mxu0 %v614
        %686 = vmatpush.msra.mxu0 %v613
        %687 = vmatpush.msra.mxu0 %v612
        %688 = vmatpush.msra.mxu0 %v611
        %689 = vmatpush.msra.mxu0 %v610
        %690 = vmatpush.msra.mxu0 %v609
        %691 = vmatmul.f32.gmra.mxu0 %v575
        %v692 = vpop.f32.mrf.mxu0
        %v693 = vadd.f32 %v670, %v692
        %694 = vmatmul.f32.gmra.mxu0 %v576
        %v695 = vpop.f32.mrf.mxu0
        %v696 = vadd.f32 %v673, %v695
        %697 = vdwg.mxu0
        %v698 = vmax.f32 %v693, 0.0
        %v699 = vmax.f32 %v696, 0.0
        %v700 = vld [vmem:[#allocation11] sm:$0xff]
        %v701 = vld [vmem:[#allocation11 + $0x8] sm:$0xff]
        %v702 = vld [vmem:[#allocation11 + $0x10] sm:$0xff]
        %v703 = vld [vmem:[#allocation11 + $0x18] sm:$0xff]
        %v704 = vld [vmem:[#allocation11 + $0x20] sm:$0xff]
        %v705 = vld [vmem:[#allocation11 + $0x28] sm:$0xff]
        %v706 = vld [vmem:[#allocation11 + $0x30] sm:$0xff]
        %v707 = vld [vmem:[#allocation11 + $0x38] sm:$0xff]
        %v708 = vld [vmem:[#allocation11 + $0x40] sm:$0xff]
        %v709 = vld [vmem:[#allocation11 + $0x48] sm:$0xff]
        %v710 = vld [vmem:[#allocation11 + $0x50] sm:$0xff]
        %v711 = vld [vmem:[#allocation11 + $0x58] sm:$0xff]
        %v712 = vld [vmem:[#allocation11 + $0x60] sm:$0xff]
        %v713 = vld [vmem:[#allocation11 + $0x68] sm:$0xff]
        %v714 = vld [vmem:[#allocation11 + $0x70] sm:$0xff]
        %v715 = vld [vmem:[#allocation11 + $0x78] sm:$0xff]
        %v716 = vld [vmem:[%s6] sm:$0x1]
        %v718 = vperm.slane %v716, 0
        %720 = vmatpush.msra.mxu0 %v715
        %721 = vmatpush.msra.mxu0 %v714
        %722 = vmatpush.msra.mxu0 %v713
        %723 = vmatpush.msra.mxu0 %v712
        %724 = vmatpush.msra.mxu0 %v711
        %725 = vmatpush.msra.mxu0 %v710
        %726 = vmatpush.msra.mxu0 %v709
        %727 = vmatpush.msra.mxu0 %v708
        %728 = vmatpush.msra.mxu0 %v707
        %729 = vmatpush.msra.mxu0 %v706
        %730 = vmatpush.msra.mxu0 %v705
        %731 = vmatpush.msra.mxu0 %v704
        %732 = vmatpush.msra.mxu0 %v703
        %733 = vmatpush.msra.mxu0 %v702
        %734 = vmatpush.msra.mxu0 %v701
        %735 = vmatpush.msra.mxu0 %v700
        %736 = vmatmul.f32.gmra.mxu0 %v440
        %v737 = vpop.f32.mrf.mxu0
        %v738 = vadd.f32 %v718, %v737
        %739 = vmatmul.f32.gmra.mxu0 %v441
        %v740 = vpop.f32.mrf.mxu0
        %v741 = vadd.f32 %v718, %v740
        %742 = vdwg.mxu0
        %v743 = vadd.f32 %v698, %v738
        %v744 = vadd.f32 %v699, %v741
        %v745 = vmax.f32 %v743, 0.0
        %v746 = vmax.f32 %v744, 0.0
        %747 = vst [vmem:[#allocation2 + $0x8] sm:$0xff] %v745
        %748 = vst [vmem:[#allocation2 + $0x10] sm:$0xff] %v746
        %v749 = vld [vmem:[#allocation2 + $0x8] sm:$0xff]
        %v750 = vld [vmem:[#allocation2 + $0x10] sm:$0xff]
        %v751 = vld [vmem:[#allocation2 + $0x4] sm:$0xff]
        %v752 = vld [vmem:[#allocation2 + $0xc] sm:$0xff]
        %v753 = vld [vmem:[#allocation2 + $0x6] sm:$0xff]
        %v754 = vld [vmem:[#allocation2 + $0xe] sm:$0xff]
        %s755 = scalar_lea.vmem [#allocation6], 384
        %v756 = vld [vmem:[%s755] sm:$0xff]
        %v757 = vld [vmem:[%s755 + $0x8] sm:$0xff]
        %v758 = vld [vmem:[%s755 + $0x10] sm:$0xff]
        %v759 = vld [vmem:[%s755 + $0x18] sm:$0xff]
        %v760 = vld [vmem:[%s755 + $0x20] sm:$0xff]
        %v761 = vld [vmem:[%s755 + $0x28] sm:$0xff]
        %v762 = vld [vmem:[%s755 + $0x30] sm:$0xff]
        %v763 = vld [vmem:[%s755 + $0x38] sm:$0xff]
        %v764 = vld [vmem:[%s755 + $0x40] sm:$0xff]
        %v765 = vld [vmem:[%s755 + $0x48] sm:$0xff]
        %v766 = vld [vmem:[%s755 + $0x50] sm:$0xff]
        %v767 = vld [vmem:[%s755 + $0x58] sm:$0xff]
        %v768 = vld [vmem:[%s755 + $0x60] sm:$0xff]
        %v769 = vld [vmem:[%s755 + $0x68] sm:$0xff]
        %v770 = vld [vmem:[%s755 + $0x70] sm:$0xff]
        %v771 = vld [vmem:[%s755 + $0x78] sm:$0xff]
        %v772 = vld [vmem:[%s755 + $0x80] sm:$0xff]
        %v773 = vld [vmem:[%s755 + $0x88] sm:$0xff]
        %v774 = vld [vmem:[%s755 + $0x90] sm:$0xff]
        %v775 = vld [vmem:[%s755 + $0x98] sm:$0xff]
        %v776 = vld [vmem:[%s755 + $0xa0] sm:$0xff]
        %v777 = vld [vmem:[%s755 + $0xa8] sm:$0xff]
        %v778 = vld [vmem:[%s755 + $0xb0] sm:$0xff]
        %v779 = vld [vmem:[%s755 + $0xb8] sm:$0xff]
        %v780 = vld [vmem:[%s755 + $0xc0] sm:$0xff]
        %v781 = vld [vmem:[%s755 + $0xc8] sm:$0xff]
        %v782 = vld [vmem:[%s755 + $0xd0] sm:$0xff]
        %v783 = vld [vmem:[%s755 + $0xd8] sm:$0xff]
        %v784 = vld [vmem:[%s755 + $0xe0] sm:$0xff]
        %v785 = vld [vmem:[%s755 + $0xe8] sm:$0xff]
        %v786 = vld [vmem:[%s755 + $0xf0] sm:$0xff]
        %v787 = vld [vmem:[%s755 + $0xf8] sm:$0xff]
        %v788 = vld [vmem:[%s755 + $0x100] sm:$0xff]
        %v789 = vld [vmem:[%s755 + $0x108] sm:$0xff]
        %v790 = vld [vmem:[%s755 + $0x110] sm:$0xff]
        %v791 = vld [vmem:[%s755 + $0x118] sm:$0xff]
        %v792 = vld [vmem:[%s755 + $0x120] sm:$0xff]
        %v793 = vld [vmem:[%s755 + $0x128] sm:$0xff]
        %v794 = vld [vmem:[%s755 + $0x130] sm:$0xff]
        %v795 = vld [vmem:[%s755 + $0x138] sm:$0xff]
        %v796 = vld [vmem:[%s755 + $0x140] sm:$0xff]
        %v797 = vld [vmem:[%s755 + $0x148] sm:$0xff]
        %v798 = vld [vmem:[%s755 + $0x150] sm:$0xff]
        %v799 = vld [vmem:[%s755 + $0x158] sm:$0xff]
        %v800 = vld [vmem:[%s755 + $0x160] sm:$0xff]
        %v801 = vld [vmem:[%s755 + $0x168] sm:$0xff]
        %v802 = vld [vmem:[%s755 + $0x170] sm:$0xff]
        %v803 = vld [vmem:[%s755 + $0x178] sm:$0xff]
        %s804 = scalar_lea.vmem [#allocation8], 1
        %v805 = vld [vmem:[%s804] sm:$0x1]
        %v807 = vperm.slane %v805, 0
        %809 = vmatpush.msra.mxu0 %v771
        %810 = vmatpush.msra.mxu0 %v770
        %811 = vmatpush.msra.mxu0 %v769
        %812 = vmatpush.msra.mxu0 %v768
        %813 = vmatpush.msra.mxu0 %v767
        %814 = vmatpush.msra.mxu0 %v766
        %815 = vmatpush.msra.mxu0 %v765
        %816 = vmatpush.msra.mxu0 %v764
        %817 = vmatpush.msra.mxu0 %v763
        %818 = vmatpush.msra.mxu0 %v762
        %819 = vmatpush.msra.mxu0 %v761
        %820 = vmatpush.msra.mxu0 %v760
        %821 = vmatpush.msra.mxu0 %v759
        %822 = vmatpush.msra.mxu0 %v758
        %823 = vmatpush.msra.mxu0 %v757
        %824 = vmatpush.msra.mxu0 %v756
        %825 = vmatmul.f32.gmra.mxu0 %v751
        %v826 = vpop.f32.mrf.mxu0
        %v827 = vadd.f32 %v807, %v826
        %828 = vmatmul.f32.gmra.mxu0 %v752
        %v829 = vpop.f32.mrf.mxu0
        %v830 = vadd.f32 %v807, %v829
        %831 = vdwg.mxu0
        %832 = vmatpush.msra.mxu0 %v787
        %833 = vmatpush.msra.mxu0 %v786
        %834 = vmatpush.msra.mxu0 %v785
        %835 = vmatpush.msra.mxu0 %v784
        %836 = vmatpush.msra.mxu0 %v783
        %837 = vmatpush.msra.mxu0 %v782
        %838 = vmatpush.msra.mxu0 %v781
        %839 = vmatpush.msra.mxu0 %v780
        %840 = vmatpush.msra.mxu0 %v779
        %841 = vmatpush.msra.mxu0 %v778
        %842 = vmatpush.msra.mxu0 %v777
        %843 = vmatpush.msra.mxu0 %v776
        %844 = vmatpush.msra.mxu0 %v775
        %845 = vmatpush.msra.mxu0 %v774
        %846 = vmatpush.msra.mxu0 %v773
        %847 = vmatpush.msra.mxu0 %v772
        %848 = vmatmul.f32.gmra.mxu0 %v753
        %v849 = vpop.f32.mrf.mxu0
        %v850 = vadd.f32 %v827, %v849
        %851 = vmatmul.f32.gmra.mxu0 %v754
        %v852 = vpop.f32.mrf.mxu0
        %v853 = vadd.f32 %v830, %v852
        %854 = vdwg.mxu0
        %855 = vmatpush.msra.mxu0 %v803
        %856 = vmatpush.msra.mxu0 %v802
        %857 = vmatpush.msra.mxu0 %v801
        %858 = vmatpush.msra.mxu0 %v800
        %859 = vmatpush.msra.mxu0 %v799
        %860 = vmatpush.msra.mxu0 %v798
        %861 = vmatpush.msra.mxu0 %v797
        %862 = vmatpush.msra.mxu0 %v796
        %863 = vmatpush.msra.mxu0 %v795
        %864 = vmatpush.msra.mxu0 %v794
        %865 = vmatpush.msra.mxu0 %v793
        %866 = vmatpush.msra.mxu0 %v792
        %867 = vmatpush.msra.mxu0 %v791
        %868 = vmatpush.msra.mxu0 %v790
        %869 = vmatpush.msra.mxu0 %v789
        %870 = vmatpush.msra.mxu0 %v788
        %871 = vmatmul.f32.gmra.mxu0 %v749
        %v872 = vpop.f32.mrf.mxu0
        %v873 = vadd.f32 %v850, %v872
        %874 = vmatmul.f32.gmra.mxu0 %v750
        %v875 = vpop.f32.mrf.mxu0
        %v876 = vadd.f32 %v853, %v875
        %877 = vdwg.mxu0
        %v878 = vmax.f32 %v873, 0.0
        %v879 = vmax.f32 %v876, 0.0
        %880 = vst [vmem:[#allocation2 + $0x8] sm:$0xff] %v878
        %881 = vst [vmem:[#allocation2 + $0x10] sm:$0xff] %v879
        %v882 = vld [vmem:[#allocation2 + $0x4] sm:$0xff]
        %v883 = vld [vmem:[#allocation2 + $0xc] sm:$0xff]
        %v884 = vld [vmem:[#allocation2 + $0x6] sm:$0xff]
        %v885 = vld [vmem:[#allocation2 + $0xe] sm:$0xff]
        %v886 = vld [vmem:[#allocation2 + $0x8] sm:$0xff]
        %v887 = vld [vmem:[#allocation2 + $0x10] sm:$0xff]
        %s888 = scalar_lea.vmem [#allocation9], 384
        %v889 = vld [vmem:[%s888] sm:$0xff]
        %v890 = vld [vmem:[%s888 + $0x8] sm:$0xff]
        %v891 = vld [vmem:[%s888 + $0x10] sm:$0xff]
        %v892 = vld [vmem:[%s888 + $0x18] sm:$0xff]
        %v893 = vld [vmem:[%s888 + $0x20] sm:$0xff]
        %v894 = vld [vmem:[%s888 + $0x28] sm:$0xff]
        %v895 = vld [vmem:[%s888 + $0x30] sm:$0xff]
        %v896 = vld [vmem:[%s888 + $0x38] sm:$0xff]
        %v897 = vld [vmem:[%s888 + $0x40] sm:$0xff]
        %v898 = vld [vmem:[%s888 + $0x48] sm:$0xff]
        %v899 = vld [vmem:[%s888 + $0x50] sm:$0xff]
        %v900 = vld [vmem:[%s888 + $0x58] sm:$0xff]
        %v901 = vld [vmem:[%s888 + $0x60] sm:$0xff]
        %v902 = vld [vmem:[%s888 + $0x68] sm:$0xff]
        %v903 = vld [vmem:[%s888 + $0x70] sm:$0xff]
        %v904 = vld [vmem:[%s888 + $0x78] sm:$0xff]
        %v905 = vld [vmem:[%s888 + $0x80] sm:$0xff]
        %v906 = vld [vmem:[%s888 + $0x88] sm:$0xff]
        %v907 = vld [vmem:[%s888 + $0x90] sm:$0xff]
        %v908 = vld [vmem:[%s888 + $0x98] sm:$0xff]
        %v909 = vld [vmem:[%s888 + $0xa0] sm:$0xff]
        %v910 = vld [vmem:[%s888 + $0xa8] sm:$0xff]
        %v911 = vld [vmem:[%s888 + $0xb0] sm:$0xff]
        %v912 = vld [vmem:[%s888 + $0xb8] sm:$0xff]
        %v913 = vld [vmem:[%s888 + $0xc0] sm:$0xff]
        %v914 = vld [vmem:[%s888 + $0xc8] sm:$0xff]
        %v915 = vld [vmem:[%s888 + $0xd0] sm:$0xff]
        %v916 = vld [vmem:[%s888 + $0xd8] sm:$0xff]
        %v917 = vld [vmem:[%s888 + $0xe0] sm:$0xff]
        %v918 = vld [vmem:[%s888 + $0xe8] sm:$0xff]
        %v919 = vld [vmem:[%s888 + $0xf0] sm:$0xff]
        %v920 = vld [vmem:[%s888 + $0xf8] sm:$0xff]
        %v921 = vld [vmem:[%s888 + $0x100] sm:$0xff]
        %v922 = vld [vmem:[%s888 + $0x108] sm:$0xff]
        %v923 = vld [vmem:[%s888 + $0x110] sm:$0xff]
        %v924 = vld [vmem:[%s888 + $0x118] sm:$0xff]
        %v925 = vld [vmem:[%s888 + $0x120] sm:$0xff]
        %v926 = vld [vmem:[%s888 + $0x128] sm:$0xff]
        %v927 = vld [vmem:[%s888 + $0x130] sm:$0xff]
        %v928 = vld [vmem:[%s888 + $0x138] sm:$0xff]
        %v929 = vld [vmem:[%s888 + $0x140] sm:$0xff]
        %v930 = vld [vmem:[%s888 + $0x148] sm:$0xff]
        %v931 = vld [vmem:[%s888 + $0x150] sm:$0xff]
        %v932 = vld [vmem:[%s888 + $0x158] sm:$0xff]
        %v933 = vld [vmem:[%s888 + $0x160] sm:$0xff]
        %v934 = vld [vmem:[%s888 + $0x168] sm:$0xff]
        %v935 = vld [vmem:[%s888 + $0x170] sm:$0xff]
        %v936 = vld [vmem:[%s888 + $0x178] sm:$0xff]
        %s937 = scalar_lea.vmem %s4, 1
        %v938 = vld [vmem:[%s937] sm:$0x1]
        %v940 = vperm.slane %v938, 0
        %942 = vmatpush.msra.mxu0 %v904
        %943 = vmatpush.msra.mxu0 %v903
        %944 = vmatpush.msra.mxu0 %v902
        %945 = vmatpush.msra.mxu0 %v901
        %946 = vmatpush.msra.mxu0 %v900
        %947 = vmatpush.msra.mxu0 %v899
        %948 = vmatpush.msra.mxu0 %v898
        %949 = vmatpush.msra.mxu0 %v897
        %950 = vmatpush.msra.mxu0 %v896
        %951 = vmatpush.msra.mxu0 %v895
        %952 = vmatpush.msra.mxu0 %v894
        %953 = vmatpush.msra.mxu0 %v893
        %954 = vmatpush.msra.mxu0 %v892
        %955 = vmatpush.msra.mxu0 %v891
        %956 = vmatpush.msra.mxu0 %v890
        %957 = vmatpush.msra.mxu0 %v889
        %958 = vmatmul.f32.gmra.mxu0 %v882
        %v959 = vpop.f32.mrf.mxu0
        %v960 = vadd.f32 %v940, %v959
        %961 = vmatmul.f32.gmra.mxu0 %v883
        %v962 = vpop.f32.mrf.mxu0
        %v963 = vadd.f32 %v940, %v962
        %964 = vdwg.mxu0
        %965 = vmatpush.msra.mxu0 %v920
        %966 = vmatpush.msra.mxu0 %v919
        %967 = vmatpush.msra.mxu0 %v918
        %968 = vmatpush.msra.mxu0 %v917
        %969 = vmatpush.msra.mxu0 %v916
        %970 = vmatpush.msra.mxu0 %v915
        %971 = vmatpush.msra.mxu0 %v914
        %972 = vmatpush.msra.mxu0 %v913
        %973 = vmatpush.msra.mxu0 %v912
        %974 = vmatpush.msra.mxu0 %v911
        %975 = vmatpush.msra.mxu0 %v910
        %976 = vmatpush.msra.mxu0 %v909
        %977 = vmatpush.msra.mxu0 %v908
        %978 = vmatpush.msra.mxu0 %v907
        %979 = vmatpush.msra.mxu0 %v906
        %980 = vmatpush.msra.mxu0 %v905
        %981 = vmatmul.f32.gmra.mxu0 %v884
        %v982 = vpop.f32.mrf.mxu0
        %v983 = vadd.f32 %v960, %v982
        %984 = vmatmul.f32.gmra.mxu0 %v885
        %v985 = vpop.f32.mrf.mxu0
        %v986 = vadd.f32 %v963, %v985
        %987 = vdwg.mxu0
        %988 = vmatpush.msra.mxu0 %v936
        %989 = vmatpush.msra.mxu0 %v935
        %990 = vmatpush.msra.mxu0 %v934
        %991 = vmatpush.msra.mxu0 %v933
        %992 = vmatpush.msra.mxu0 %v932
        %993 = vmatpush.msra.mxu0 %v931
        %994 = vmatpush.msra.mxu0 %v930
        %995 = vmatpush.msra.mxu0 %v929
        %996 = vmatpush.msra.mxu0 %v928
        %997 = vmatpush.msra.mxu0 %v927
        %998 = vmatpush.msra.mxu0 %v926
        %999 = vmatpush.msra.mxu0 %v925
        %1000 = vmatpush.msra.mxu0 %v924
        %1001 = vmatpush.msra.mxu0 %v923
        %1002 = vmatpush.msra.mxu0 %v922
        %1003 = vmatpush.msra.mxu0 %v921
        %1004 = vmatmul.f32.gmra.mxu0 %v886
        %v1005 = vpop.f32.mrf.mxu0
        %v1006 = vadd.f32 %v983, %v1005
        %1007 = vmatmul.f32.gmra.mxu0 %v887
        %v1008 = vpop.f32.mrf.mxu0
        %v1009 = vadd.f32 %v986, %v1008
        %1010 = vdwg.mxu0
        %v1011 = vmax.f32 %v1006, 0.0
        %v1012 = vmax.f32 %v1009, 0.0
        %v1013 = vadd.f32 %v1011, %v749
        %v1014 = vadd.f32 %v1012, %v750
        %v1015 = vmax.f32 %v1013, 0.0
        %v1016 = vmax.f32 %v1014, 0.0
        %1017 = vst [vmem:[#allocation2 + $0x8] sm:$0xff] %v1015
        %1018 = vst [vmem:[#allocation2 + $0x10] sm:$0xff] %v1016
        %v1019 = vld [vmem:[#allocation2 + $0x8] sm:$0xff]
        %v1020 = vld [vmem:[#allocation2 + $0x10] sm:$0xff]
        %v1021 = vld [vmem:[#allocation2] sm:$0xff]
        %v1022 = vld [vmem:[#allocation2 + $0x8] sm:$0xff]
        %v1023 = vld [vmem:[#allocation2 + $0x4] sm:$0xff]
        %v1024 = vld [vmem:[#allocation2 + $0xc] sm:$0xff]
        %s1025 = scalar_lea.vmem [#allocation6], 768
        %v1026 = vld [vmem:[%s1025] sm:$0xff]
        %v1027 = vld [vmem:[%s1025 + $0x8] sm:$0xff]
        %v1028 = vld [vmem:[%s1025 + $0x10] sm:$0xff]
        %v1029 = vld [vmem:[%s1025 + $0x18] sm:$0xff]
        %v1030 = vld [vmem:[%s1025 + $0x20] sm:$0xff]
        %v1031 = vld [vmem:[%s1025 + $0x28] sm:$0xff]
        %v1032 = vld [vmem:[%s1025 + $0x30] sm:$0xff]
        %v1033 = vld [vmem:[%s1025 + $0x38] sm:$0xff]
        %v1034 = vld [vmem:[%s1025 + $0x40] sm:$0xff]
        %v1035 = vld [vmem:[%s1025 + $0x48] sm:$0xff]
        %v1036 = vld [vmem:[%s1025 + $0x50] sm:$0xff]
        %v1037 = vld [vmem:[%s1025 + $0x58] sm:$0xff]
        %v1038 = vld [vmem:[%s1025 + $0x60] sm:$0xff]
        %v1039 = vld [vmem:[%s1025 + $0x68] sm:$0xff]
        %v1040 = vld [vmem:[%s1025 + $0x70] sm:$0xff]
        %v1041 = vld [vmem:[%s1025 + $0x78] sm:$0xff]
        %v1042 = vld [vmem:[%s1025 + $0x80] sm:$0xff]
        %v1043 = vld [vmem:[%s1025 + $0x88] sm:$0xff]
        %v1044 = vld [vmem:[%s1025 + $0x90] sm:$0xff]
        %v1045 = vld [vmem:[%s1025 + $0x98] sm:$0xff]
        %v1046 = vld [vmem:[%s1025 + $0xa0] sm:$0xff]
        %v1047 = vld [vmem:[%s1025 + $0xa8] sm:$0xff]
        %v1048 = vld [vmem:[%s1025 + $0xb0] sm:$0xff]
        %v1049 = vld [vmem:[%s1025 + $0xb8] sm:$0xff]
        %v1050 = vld [vmem:[%s1025 + $0xc0] sm:$0xff]
        %v1051 = vld [vmem:[%s1025 + $0xc8] sm:$0xff]
        %v1052 = vld [vmem:[%s1025 + $0xd0] sm:$0xff]
        %v1053 = vld [vmem:[%s1025 + $0xd8] sm:$0xff]
        %v1054 = vld [vmem:[%s1025 + $0xe0] sm:$0xff]
        %v1055 = vld [vmem:[%s1025 + $0xe8] sm:$0xff]
        %v1056 = vld [vmem:[%s1025 + $0xf0] sm:$0xff]
        %v1057 = vld [vmem:[%s1025 + $0xf8] sm:$0xff]
        %v1058 = vld [vmem:[%s1025 + $0x100] sm:$0xff]
        %v1059 = vld [vmem:[%s1025 + $0x108] sm:$0xff]
        %v1060 = vld [vmem:[%s1025 + $0x110] sm:$0xff]
        %v1061 = vld [vmem:[%s1025 + $0x118] sm:$0xff]
        %v1062 = vld [vmem:[%s1025 + $0x120] sm:$0xff]
        %v1063 = vld [vmem:[%s1025 + $0x128] sm:$0xff]
        %v1064 = vld [vmem:[%s1025 + $0x130] sm:$0xff]
        %v1065 = vld [vmem:[%s1025 + $0x138] sm:$0xff]
        %v1066 = vld [vmem:[%s1025 + $0x140] sm:$0xff]
        %v1067 = vld [vmem:[%s1025 + $0x148] sm:$0xff]
        %v1068 = vld [vmem:[%s1025 + $0x150] sm:$0xff]
        %v1069 = vld [vmem:[%s1025 + $0x158] sm:$0xff]
        %v1070 = vld [vmem:[%s1025 + $0x160] sm:$0xff]
        %v1071 = vld [vmem:[%s1025 + $0x168] sm:$0xff]
        %v1072 = vld [vmem:[%s1025 + $0x170] sm:$0xff]
        %v1073 = vld [vmem:[%s1025 + $0x178] sm:$0xff]
        %s1074 = scalar_lea.vmem [#allocation8], 2
        %v1075 = vld [vmem:[%s1074] sm:$0x1]
        %v1077 = vperm.slane %v1075, 0
        %1079 = vmatpush.msra.mxu0 %v1041
        %1080 = vmatpush.msra.mxu0 %v1040
        %1081 = vmatpush.msra.mxu0 %v1039
        %1082 = vmatpush.msra.mxu0 %v1038
        %1083 = vmatpush.msra.mxu0 %v1037
        %1084 = vmatpush.msra.mxu0 %v1036
        %1085 = vmatpush.msra.mxu0 %v1035
        %1086 = vmatpush.msra.mxu0 %v1034
        %1087 = vmatpush.msra.mxu0 %v1033
        %1088 = vmatpush.msra.mxu0 %v1032
        %1089 = vmatpush.msra.mxu0 %v1031
        %1090 = vmatpush.msra.mxu0 %v1030
        %1091 = vmatpush.msra.mxu0 %v1029
        %1092 = vmatpush.msra.mxu0 %v1028
        %1093 = vmatpush.msra.mxu0 %v1027
        %1094 = vmatpush.msra.mxu0 %v1026
        %1095 = vmatmul.f32.gmra.mxu0 %v1021
        %v1096 = vpop.f32.mrf.mxu0
        %v1097 = vadd.f32 %v1077, %v1096
        %1098 = vmatmul.f32.gmra.mxu0 %v1022
        %v1099 = vpop.f32.mrf.mxu0
        %v1100 = vadd.f32 %v1077, %v1099
        %1101 = vdwg.mxu0
        %1102 = vmatpush.msra.mxu0 %v1057
        %1103 = vmatpush.msra.mxu0 %v1056
        %1104 = vmatpush.msra.mxu0 %v1055
        %1105 = vmatpush.msra.mxu0 %v1054
        %1106 = vmatpush.msra.mxu0 %v1053
        %1107 = vmatpush.msra.mxu0 %v1052
        %1108 = vmatpush.msra.mxu0 %v1051
        %1109 = vmatpush.msra.mxu0 %v1050
        %1110 = vmatpush.msra.mxu0 %v1049
        %1111 = vmatpush.msra.mxu0 %v1048
        %1112 = vmatpush.msra.mxu0 %v1047
        %1113 = vmatpush.msra.mxu0 %v1046
        %1114 = vmatpush.msra.mxu0 %v1045
        %1115 = vmatpush.msra.mxu0 %v1044
        %1116 = vmatpush.msra.mxu0 %v1043
        %1117 = vmatpush.msra.mxu0 %v1042
        %1118 = vmatmul.f32.gmra.mxu0 %v1023
        %v1119 = vpop.f32.mrf.mxu0
        %v1120 = vadd.f32 %v1097, %v1119
        %1121 = vmatmul.f32.gmra.mxu0 %v1024
        %v1122 = vpop.f32.mrf.mxu0
        %v1123 = vadd.f32 %v1100, %v1122
        %1124 = vdwg.mxu0
        %1125 = vmatpush.msra.mxu0 %v1073
        %1126 = vmatpush.msra.mxu0 %v1072
        %1127 = vmatpush.msra.mxu0 %v1071
        %1128 = vmatpush.msra.mxu0 %v1070
        %1129 = vmatpush.msra.mxu0 %v1069
        %1130 = vmatpush.msra.mxu0 %v1068
        %1131 = vmatpush.msra.mxu0 %v1067
        %1132 = vmatpush.msra.mxu0 %v1066
        %1133 = vmatpush.msra.mxu0 %v1065
        %1134 = vmatpush.msra.mxu0 %v1064
        %1135 = vmatpush.msra.mxu0 %v1063
        %1136 = vmatpush.msra.mxu0 %v1062
        %1137 = vmatpush.msra.mxu0 %v1061
        %1138 = vmatpush.msra.mxu0 %v1060
        %1139 = vmatpush.msra.mxu0 %v1059
        %1140 = vmatpush.msra.mxu0 %v1058
        %1141 = vmatmul.f32.gmra.mxu0 %v1019
        %v1142 = vpop.f32.mrf.mxu0
        %v1143 = vadd.f32 %v1120, %v1142
        %1144 = vmatmul.f32.gmra.mxu0 %v1020
        %v1145 = vpop.f32.mrf.mxu0
        %v1146 = vadd.f32 %v1123, %v1145
        %1147 = vdwg.mxu0
        %v1148 = vmax.f32 %v1143, 0.0
        %v1149 = vmax.f32 %v1146, 0.0
        %1150 = vst [vmem:[#allocation2 + $0x8] sm:$0xff] %v1148
        %1151 = vst [vmem:[#allocation2 + $0x10] sm:$0xff] %v1149
        %v1152 = vld [vmem:[#allocation2] sm:$0xff]
        %v1153 = vld [vmem:[#allocation2 + $0x8] sm:$0xff]
        %v1154 = vld [vmem:[#allocation2 + $0x4] sm:$0xff]
        %v1155 = vld [vmem:[#allocation2 + $0xc] sm:$0xff]
        %v1156 = vld [vmem:[#allocation2 + $0x8] sm:$0xff]
        %v1157 = vld [vmem:[#allocation2 + $0x10] sm:$0xff]
        %s1158 = scalar_lea.vmem [#allocation9], 768
        %v1159 = vld [vmem:[%s1158] sm:$0xff]
        %v1160 = vld [vmem:[%s1158 + $0x8] sm:$0xff]
        %v1161 = vld [vmem:[%s1158 + $0x10] sm:$0xff]
        %v1162 = vld [vmem:[%s1158 + $0x18] sm:$0xff]
        %v1163 = vld [vmem:[%s1158 + $0x20] sm:$0xff]
        %v1164 = vld [vmem:[%s1158 + $0x28] sm:$0xff]
        %v1165 = vld [vmem:[%s1158 + $0x30] sm:$0xff]
        %v1166 = vld [vmem:[%s1158 + $0x38] sm:$0xff]
        %v1167 = vld [vmem:[%s1158 + $0x40] sm:$0xff]
        %v1168 = vld [vmem:[%s1158 + $0x48] sm:$0xff]
        %v1169 = vld [vmem:[%s1158 + $0x50] sm:$0xff]
        %v1170 = vld [vmem:[%s1158 + $0x58] sm:$0xff]
        %v1171 = vld [vmem:[%s1158 + $0x60] sm:$0xff]
        %v1172 = vld [vmem:[%s1158 + $0x68] sm:$0xff]
        %v1173 = vld [vmem:[%s1158 + $0x70] sm:$0xff]
        %v1174 = vld [vmem:[%s1158 + $0x78] sm:$0xff]
        %v1175 = vld [vmem:[%s1158 + $0x80] sm:$0xff]
        %v1176 = vld [vmem:[%s1158 + $0x88] sm:$0xff]
        %v1177 = vld [vmem:[%s1158 + $0x90] sm:$0xff]
        %v1178 = vld [vmem:[%s1158 + $0x98] sm:$0xff]
        %v1179 = vld [vmem:[%s1158 + $0xa0] sm:$0xff]
        %v1180 = vld [vmem:[%s1158 + $0xa8] sm:$0xff]
        %v1181 = vld [vmem:[%s1158 + $0xb0] sm:$0xff]
        %v1182 = vld [vmem:[%s1158 + $0xb8] sm:$0xff]
        %v1183 = vld [vmem:[%s1158 + $0xc0] sm:$0xff]
        %v1184 = vld [vmem:[%s1158 + $0xc8] sm:$0xff]
        %v1185 = vld [vmem:[%s1158 + $0xd0] sm:$0xff]
        %v1186 = vld [vmem:[%s1158 + $0xd8] sm:$0xff]
        %v1187 = vld [vmem:[%s1158 + $0xe0] sm:$0xff]
        %v1188 = vld [vmem:[%s1158 + $0xe8] sm:$0xff]
        %v1189 = vld [vmem:[%s1158 + $0xf0] sm:$0xff]
        %v1190 = vld [vmem:[%s1158 + $0xf8] sm:$0xff]
        %v1191 = vld [vmem:[%s1158 + $0x100] sm:$0xff]
        %v1192 = vld [vmem:[%s1158 + $0x108] sm:$0xff]
        %v1193 = vld [vmem:[%s1158 + $0x110] sm:$0xff]
        %v1194 = vld [vmem:[%s1158 + $0x118] sm:$0xff]
        %v1195 = vld [vmem:[%s1158 + $0x120] sm:$0xff]
        %v1196 = vld [vmem:[%s1158 + $0x128] sm:$0xff]
        %v1197 = vld [vmem:[%s1158 + $0x130] sm:$0xff]
        %v1198 = vld [vmem:[%s1158 + $0x138] sm:$0xff]
        %v1199 = vld [vmem:[%s1158 + $0x140] sm:$0xff]
        %v1200 = vld [vmem:[%s1158 + $0x148] sm:$0xff]
        %v1201 = vld [vmem:[%s1158 + $0x150] sm:$0xff]
        %v1202 = vld [vmem:[%s1158 + $0x158] sm:$0xff]
        %v1203 = vld [vmem:[%s1158 + $0x160] sm:$0xff]
        %v1204 = vld [vmem:[%s1158 + $0x168] sm:$0xff]
        %v1205 = vld [vmem:[%s1158 + $0x170] sm:$0xff]
        %v1206 = vld [vmem:[%s1158 + $0x178] sm:$0xff]
        %s1207 = scalar_lea.vmem %s4, 2
        %v1208 = vld [vmem:[%s1207] sm:$0x1]
        %v1210 = vperm.slane %v1208, 0
        %1212 = vmatpush.msra.mxu0 %v1174
        %1213 = vmatpush.msra.mxu0 %v1173
        %1214 = vmatpush.msra.mxu0 %v1172
        %1215 = vmatpush.msra.mxu0 %v1171
        %1216 = vmatpush.msra.mxu0 %v1170
        %1217 = vmatpush.msra.mxu0 %v1169
        %1218 = vmatpush.msra.mxu0 %v1168
        %1219 = vmatpush.msra.mxu0 %v1167
        %1220 = vmatpush.msra.mxu0 %v1166
        %1221 = vmatpush.msra.mxu0 %v1165
        %1222 = vmatpush.msra.mxu0 %v1164
        %1223 = vmatpush.msra.mxu0 %v1163
        %1224 = vmatpush.msra.mxu0 %v1162
        %1225 = vmatpush.msra.mxu0 %v1161
        %1226 = vmatpush.msra.mxu0 %v1160
        %1227 = vmatpush.msra.mxu0 %v1159
        %1228 = vmatmul.f32.gmra.mxu0 %v1152
        %v1229 = vpop.f32.mrf.mxu0
        %v1230 = vadd.f32 %v1210, %v1229
        %1231 = vmatmul.f32.gmra.mxu0 %v1153
        %v1232 = vpop.f32.mrf.mxu0
        %v1233 = vadd.f32 %v1210, %v1232
        %1234 = vdwg.mxu0
        %1235 = vmatpush.msra.mxu0 %v1190
        %1236 = vmatpush.msra.mxu0 %v1189
        %1237 = vmatpush.msra.mxu0 %v1188
        %1238 = vmatpush.msra.mxu0 %v1187
        %1239 = vmatpush.msra.mxu0 %v1186
        %1240 = vmatpush.msra.mxu0 %v1185
        %1241 = vmatpush.msra.mxu0 %v1184
        %1242 = vmatpush.msra.mxu0 %v1183
        %1243 = vmatpush.msra.mxu0 %v1182
        %1244 = vmatpush.msra.mxu0 %v1181
        %1245 = vmatpush.msra.mxu0 %v1180
        %1246 = vmatpush.msra.mxu0 %v1179
        %1247 = vmatpush.msra.mxu0 %v1178
        %1248 = vmatpush.msra.mxu0 %v1177
        %1249 = vmatpush.msra.mxu0 %v1176
        %1250 = vmatpush.msra.mxu0 %v1175
        %1251 = vmatmul.f32.gmra.mxu0 %v1154
        %v1252 = vpop.f32.mrf.mxu0
        %v1253 = vadd.f32 %v1230, %v1252
        %1254 = vmatmul.f32.gmra.mxu0 %v1155
        %v1255 = vpop.f32.mrf.mxu0
        %v1256 = vadd.f32 %v1233, %v1255
        %1257 = vdwg.mxu0
        %1258 = vmatpush.msra.mxu0 %v1206
        %1259 = vmatpush.msra.mxu0 %v1205
        %1260 = vmatpush.msra.mxu0 %v1204
        %1261 = vmatpush.msra.mxu0 %v1203
        %1262 = vmatpush.msra.mxu0 %v1202
        %1263 = vmatpush.msra.mxu0 %v1201
        %1264 = vmatpush.msra.mxu0 %v1200
        %1265 = vmatpush.msra.mxu0 %v1199
        %1266 = vmatpush.msra.mxu0 %v1198
        %1267 = vmatpush.msra.mxu0 %v1197
        %1268 = vmatpush.msra.mxu0 %v1196
        %1269 = vmatpush.msra.mxu0 %v1195
        %1270 = vmatpush.msra.mxu0 %v1194
        %1271 = vmatpush.msra.mxu0 %v1193
        %1272 = vmatpush.msra.mxu0 %v1192
        %1273 = vmatpush.msra.mxu0 %v1191
        %1274 = vmatmul.f32.gmra.mxu0 %v1156
        %v1275 = vpop.f32.mrf.mxu0
        %v1276 = vadd.f32 %v1253, %v1275
        %1277 = vmatmul.f32.gmra.mxu0 %v1157
        %v1278 = vpop.f32.mrf.mxu0
        %v1279 = vadd.f32 %v1256, %v1278
        %1280 = vdwg.mxu0
        %v1281 = vmax.f32 %v1276, 0.0
        %v1282 = vmax.f32 %v1279, 0.0
        %s1283 = scalar_lea.vmem [#allocation11], 128
        %v1284 = vld [vmem:[%s1283] sm:$0xff]
        %v1285 = vld [vmem:[%s1283 + $0x8] sm:$0xff]
        %v1286 = vld [vmem:[%s1283 + $0x10] sm:$0xff]
        %v1287 = vld [vmem:[%s1283 + $0x18] sm:$0xff]
        %v1288 = vld [vmem:[%s1283 + $0x20] sm:$0xff]
        %v1289 = vld [vmem:[%s1283 + $0x28] sm:$0xff]
        %v1290 = vld [vmem:[%s1283 + $0x30] sm:$0xff]
        %v1291 = vld [vmem:[%s1283 + $0x38] sm:$0xff]
        %v1292 = vld [vmem:[%s1283 + $0x40] sm:$0xff]
        %v1293 = vld [vmem:[%s1283 + $0x48] sm:$0xff]
        %v1294 = vld [vmem:[%s1283 + $0x50] sm:$0xff]
        %v1295 = vld [vmem:[%s1283 + $0x58] sm:$0xff]
        %v1296 = vld [vmem:[%s1283 + $0x60] sm:$0xff]
        %v1297 = vld [vmem:[%s1283 + $0x68] sm:$0xff]
        %v1298 = vld [vmem:[%s1283 + $0x70] sm:$0xff]
        %v1299 = vld [vmem:[%s1283 + $0x78] sm:$0xff]
        %s1300 = scalar_lea.vmem %s6, 1
        %v1301 = vld [vmem:[%s1300] sm:$0x1]
        %v1303 = vperm.slane %v1301, 0
        %1305 = vmatpush.msra.mxu0 %v1299
        %1306 = vmatpush.msra.mxu0 %v1298
        %1307 = vmatpush.msra.mxu0 %v1297
        %1308 = vmatpush.msra.mxu0 %v1296
        %1309 = vmatpush.msra.mxu0 %v1295
        %1310 = vmatpush.msra.mxu0 %v1294
        %1311 = vmatpush.msra.mxu0 %v1293
        %1312 = vmatpush.msra.mxu0 %v1292
        %1313 = vmatpush.msra.mxu0 %v1291
        %1314 = vmatpush.msra.mxu0 %v1290
        %1315 = vmatpush.msra.mxu0 %v1289
        %1316 = vmatpush.msra.mxu0 %v1288
        %1317 = vmatpush.msra.mxu0 %v1287
        %1318 = vmatpush.msra.mxu0 %v1286
        %1319 = vmatpush.msra.mxu0 %v1285
        %1320 = vmatpush.msra.mxu0 %v1284
        %1321 = vmatmul.f32.gmra.mxu0 %v1019
        %v1322 = vpop.f32.mrf.mxu0
        %v1323 = vadd.f32 %v1303, %v1322
        %1324 = vmatmul.f32.gmra.mxu0 %v1020
        %v1325 = vpop.f32.mrf.mxu0
        %v1326 = vadd.f32 %v1303, %v1325
        %1327 = vdwg.mxu0
        %v1328 = vadd.f32 %v1281, %v1323
        %v1329 = vadd.f32 %v1282, %v1326
        %v1330 = vmax.f32 %v1328, 0.0
        %v1331 = vmax.f32 %v1329, 0.0
        %1332 = vst [vmem:[#allocation2 + $0x8] sm:$0xff] %v1330
        %1333 = vst [vmem:[#allocation2 + $0x10] sm:$0xff] %v1331
        %v1334 = vld [vmem:[#allocation2 + $0x17] sm:$0x1]
        %v1335 = vld [vmem:[#allocation12] sm:$0xff]
        %v1336 = vld [vmem:[#allocation12 + $0x8] sm:$0xff]
        %v1337 = vld [vmem:[#allocation12 + $0x10] sm:$0xff]
        %v1338 = vld [vmem:[#allocation12 + $0x18] sm:$0xff]
        %v1339 = vld [vmem:[#allocation12 + $0x20] sm:$0xff]
        %v1340 = vld [vmem:[#allocation12 + $0x28] sm:$0xff]
        %v1341 = vld [vmem:[#allocation12 + $0x30] sm:$0xff]
        %v1342 = vld [vmem:[#allocation12 + $0x38] sm:$0xff]
        %v1343 = vld [vmem:[#allocation12 + $0x40] sm:$0xff]
        %v1344 = vld [vmem:[#allocation12 + $0x48] sm:$0xff]
        %v1345 = vld [vmem:[#allocation12 + $0x50] sm:$0xff]
        %v1346 = vld [vmem:[#allocation12 + $0x58] sm:$0xff]
        %v1347 = vld [vmem:[#allocation12 + $0x60] sm:$0xff]
        %v1348 = vld [vmem:[#allocation12 + $0x68] sm:$0xff]
        %v1349 = vld [vmem:[#allocation12 + $0x70] sm:$0xff]
        %v1350 = vld [vmem:[#allocation12 + $0x78] sm:$0xff]
        %v1351 = vld [vmem:[%s8] sm:$0x1]
        %1352 = vmatpush.msra.mxu0 %v1350
        %1353 = vmatpush.msra.mxu0 %v1349
        %1354 = vmatpush.msra.mxu0 %v1348
        %1355 = vmatpush.msra.mxu0 %v1347
        %1356 = vmatpush.msra.mxu0 %v1346
        %1357 = vmatpush.msra.mxu0 %v1345
        %1358 = vmatpush.msra.mxu0 %v1344
        %1359 = vmatpush.msra.mxu0 %v1343
        %1360 = vmatpush.msra.mxu0 %v1342
        %1361 = vmatpush.msra.mxu0 %v1341
        %1362 = vmatpush.msra.mxu0 %v1340
        %1363 = vmatpush.msra.mxu0 %v1339
        %1364 = vmatpush.msra.mxu0 %v1338
        %1365 = vmatpush.msra.mxu0 %v1337
        %1366 = vmatpush.msra.mxu0 %v1336
        %1367 = vmatpush.msra.mxu0 %v1335
        %1368 = vmatmul.f32.gmra.mxu0 %v1334
        %v1369 = vpop.f32.mrf.mxu0
        %v1370 = vadd.f32 %v1351, %v1369
        %1371 = vdwg.mxu0
        %1372 = vst [vmem:[%s434] sm:$0x1] %v1370
        %s1373 = sand.u32 %s231, 1
        %s1374 = scalar_lea.sflag [#allocation5], %s1373
        %s1375 = sand.u32 %s231, 1
        %s1376 = scalar_lea.vmem [#allocation14], %s1375
        // Predicated region
        $region81: #{tpu_custom_call.1} parent=55 // pred_check
          %p1377 = pneg %p241
        $region82: #{tpu_custom_call.1} parent=55 // pred_check_branch
          %1379 = sbr.rel (%p1377) target = $region84
        $region83: #{tpu_custom_call.1} parent=55 // pred_region
          %1381 = vsyncadd %s1374, 0
          %s1382 = scalar_lea.hbm %s9, %s29
          %s1384 = sshll.u32 %s1376, 4
          %s1385 = int_to_ptr.vmem [resolvable:$true] %s1384
          %s1386 = sshll.u32 %s1382, 4
          %s1387 = int_to_ptr.hbm [resolvable:$true] %s1386
          %1389 = dma.vmem_to_hbm [thread:$0]  %s1385, 16, %s1387, %s1374
        $region84: #{tpu_custom_call.1} parent=55 // pred_fallthru
          _
      $region56: #{tpu_custom_call.1} parent=5 // pred_fallthru
        _
      %p1390 = scmp.le.s32.totalorder 2, %s24
      // Predicated region
      $region85: #{tpu_custom_call.1} parent=5 // pred_check
        %p1391 = pneg %p1390
      $region86: #{tpu_custom_call.1} parent=5 // pred_check_branch
        %1393 = sbr.rel (%p1391) target = $region88
      $region87: #{tpu_custom_call.1} parent=5 // pred_region
        %s1394 = ssub.s32 %s24, 2
        // Predicated region
        $region89: #{tpu_custom_call.1} parent=87 // pred_check
          %p1395 = pneg %p247
        $region90: #{tpu_custom_call.1} parent=87 // pred_check_branch
          %1397 = sbr.rel (%p1395) target = $region92
        $region91: #{tpu_custom_call.1} parent=87 // pred_region
          %s1398 = sand.u32 %s232, 1
          %s1399 = scalar_lea.sflag [#allocation5], %s1398
          %s1400 = sand.u32 %s232, 1
          %s1401 = scalar_lea.vmem [#allocation14], %s1400
          %1403 = dma.done %s1399, 16
        $region92: #{tpu_custom_call.1} parent=87 // pred_fallthru
          _
      $region88: #{tpu_custom_call.1} parent=5 // pred_fallthru
        _
    $region6: #{tpu_custom_call.1} parent=1 // loop_footer
      %s28 = sadd.s32 1, %s24
    $region7: #{tpu_custom_call.1} parent=1 // loop_footer_branch
      %23 = sbr.rel target = $region3
    $region8: #{tpu_custom_call.1} parent=1 // loop_exit
      _
    %1404 = vsyncpa [#allocation4], 1
    %s1405 = scalar_lea.sflag [#allocation4], 1
    %1406 = vsyncpa %s1405, 1
    %1407 = vsyncpa [#allocation7], 1
    %1408 = vsyncpa [#allocation10], 1
    %1409 = vsyncpa [#allocation13], 1
    %1410 = vsyncpa [#allocation5], 1
    %s1411 = scalar_lea.sflag [#allocation5], 1
    %1412 = vsyncpa %s1411, 1

</llo_original>
